<compile_context>
chip_gen: v6e
topology: v6e:2x2x1
jax: 0.10.0
libtpu: 0.0.40
codegen_flags: <defaults>
</compile_context>

<pallas_src>
import jax
import jax.numpy as jnp
from jax import lax
from jax.experimental import pallas as pl
from jax.experimental.pallas import tpu as pltpu

NEG_INF = -1e9   # bias for padded logit lanes; exp(NEG_INF - m) underflows to 0
DP = 128         # lane-dense padded feature width (D=32 -> 128)

# Row indices inside the packed weight / bias slabs.
I_WF1, I_WF2, I_WG1A, I_WG1B, I_WG2, I_WH1A, I_WH1B, I_WH2, I_WFIN = range(9)
I_BF1, I_BF2, I_BG1, I_BG2, I_BH1, I_BH2, I_BFIN = range(7)


def _cdiv(a, b):
    return -(-a // b)


def _round_up(x, m):
    return ((x + m - 1) // m) * m


# ---------------------------------------------------------------------------
# Pallas kernel: one block of BB batch elements per grid step.
# ---------------------------------------------------------------------------
def _make_kernel(L1, L2):
    Ltot = L1 + L2

    def kernel(e_ref, w_ref, b_ref, out_ref, att_sc):
        bf16, f32 = jnp.bfloat16, jnp.float32
        BB, _, Dp = e_ref.shape
        M = BB * Ltot

        bias = b_ref[...]                                    # (8, Dp) f32
        bf1 = bias[I_BF1:I_BF1 + 1]
        bf2 = bias[I_BF2:I_BF2 + 1]
        bg1 = bias[I_BG1:I_BG1 + 1]
        bg2 = bias[I_BG2:I_BG2 + 1]
        bh1 = bias[I_BH1:I_BH1 + 1]
        bh2 = bias[I_BH2:I_BH2 + 1]
        bfin = bias[I_BFIN:I_BFIN + 1]

        ea3 = e_ref[...]                                     # (BB, Ltot, Dp) bf16
        ea = ea3.reshape(M, Dp)                              # (M, Dp)

        # ---- mlp_f fused over every token of every batch element -----------
        h = jnp.dot(ea, w_ref[I_WF1], preferred_element_type=f32) + bf1
        h = jnp.maximum(h, 0.0)
        f = jnp.dot(h.astype(bf16), w_ref[I_WF2], preferred_element_type=f32) + bf2
        f = jnp.maximum(f, 0.0)                              # (M, Dp) f32
        f3 = f.reshape(BB, Ltot, Dp)
        f1 = f3[:, :L1, :].astype(bf16)                      # (BB, L1, Dp)
        f2 = f3[:, L1:, :].astype(bf16)                      # (BB, L2, Dp)

        # ---- attention scores (batched over the whole block) ---------------
        score1 = jnp.einsum('bqd,bkd->bqk', f1, f2,
                            preferred_element_type=f32)      # (BB, L1, L2)
        # score2 == score1^T; recomputed as a second tiny batched matmul
        # (same MACs as the XLU relayout it replaces, and the MXU has slack).
        score2 = jnp.einsum('bkd,bqd->bkq', f2, f1,
                            preferred_element_type=f32)      # (BB, L2, L1)

        def softmax_last(x):
            m = jnp.max(x, axis=-1, keepdims=True)
            e = jnp.exp(x - m)
            return e * pl.reciprocal(jnp.sum(e, axis=-1, keepdims=True),
                                     approx=True)

        prob1 = softmax_last(score1)                         # (BB, L1, L2)
        prob2 = softmax_last(score2)                         # (BB, L2, L1)

        e1 = ea3[:, :L1, :]
        e2 = ea3[:, L1:, :]
        att1 = jnp.einsum('bqk,bkd->bqd', prob1.astype(bf16), e2,
                          preferred_element_type=f32)        # (BB, L1, Dp)
        att2 = jnp.einsum('bkq,bqd->bkd', prob2.astype(bf16), e1,
                          preferred_element_type=f32)        # (BB, L2, Dp)

        # Assemble [att1; att2] per batch element into VMEM scratch so mlp_g
        # keeps a single M = BB*Ltot matmul without a concatenate copy.
        att_sc[:, :L1, :] = att1
        att_sc[:, L1:, :] = att2
        att = att_sc[...].reshape(M, Dp).astype(bf16)        # (M, Dp) bf16

        # ---- mlp_g; feature concat replaced by split-weight matmuls --------
        h = (jnp.dot(ea, w_ref[I_WG1A], preferred_element_type=f32)
             + jnp.dot(att, w_ref[I_WG1B], preferred_element_type=f32)
             + bg1)
        h = jnp.maximum(h, 0.0)
        g = jnp.dot(h.astype(bf16), w_ref[I_WG2], preferred_element_type=f32) + bg2
        g = jnp.maximum(g, 0.0)                              # (M, Dp) f32

        g3 = g.reshape(BB, Ltot, Dp)
        s1 = jnp.sum(g3[:, :L1, :], axis=1)                  # (BB, Dp)
        s2 = jnp.sum(g3[:, L1:, :], axis=1)                  # (BB, Dp)

        # ---- batched head: mlp_h (split-weight) + final linear + log_softmax
        h = (jnp.dot(s1.astype(bf16), w_ref[I_WH1A], preferred_element_type=f32)
             + jnp.dot(s2.astype(bf16), w_ref[I_WH1B], preferred_element_type=f32)
             + bh1)
        h = jnp.maximum(h, 0.0)
        h = jnp.dot(h.astype(bf16), w_ref[I_WH2], preferred_element_type=f32) + bh2
        h = jnp.maximum(h, 0.0)                              # (BB, Dp) f32

        logits = (jnp.dot(h.astype(bf16), w_ref[I_WFIN], preferred_element_type=f32)
                  + bfin)                                    # (BB, 128); pad lanes ~ -1e9

        m = jnp.max(logits, axis=-1, keepdims=True)
        lse = m + jnp.log(jnp.sum(jnp.exp(logits - m), axis=-1, keepdims=True))
        out_ref[...] = logits - lse                          # (BB, 128) f32

    return kernel


# ---------------------------------------------------------------------------
# Batch-block selection: M = BB*Ltot >= 256 when B allows; keep >= 2 grid
# steps (for the two v7x TensorCores) as long as M stays >= 128.
# ---------------------------------------------------------------------------
def _choose_block_b(B, Ltot, block_b=None):
    if block_b is not None:
        return max(1, min(block_b, B))
    target = max(1, 256 // Ltot)
    bb = min(B, target)
    if B >= 2 and _cdiv(B, bb) < 2 and _cdiv(B, 2) * Ltot >= 128:
        bb = _cdiv(B, 2)
    return bb


# ---------------------------------------------------------------------------
# Wrapper: embedding gather (XLA glue) + one pallas_call over batch blocks.
# ---------------------------------------------------------------------------
def decomposable_attention(ids1, ids2, kp, block_b=None):
    B, L1 = ids1.shape
    L2 = ids2.shape[1]
    Ltot = L1 + L2
    Dp = kp['embed'].shape[1]

    e1 = kp['embed'][ids1]                                   # (B, L1, Dp) bf16
    e2 = kp['embed'][ids2]                                   # (B, L2, Dp) bf16
    e_all = jnp.concatenate([e1, e2], axis=1)                # (B, Ltot, Dp)

    BB = _choose_block_b(B, Ltot, block_b)
    NB = _cdiv(B, BB)
    Bp = NB * BB
    if Bp != B:                                              # pad batch with zeros
        e_all = jnp.pad(e_all, ((0, Bp - B), (0, 0), (0, 0)))

    wpack, bpack = kp['wpack'], kp['bpack']

    in_specs = [
        pl.BlockSpec((BB, Ltot, Dp), lambda i: (i, 0, 0)),
        # Constant-index weight/bias slabs: fetched once, resident across steps.
        pl.BlockSpec(wpack.shape, lambda i: (0, 0, 0)),
        pl.BlockSpec(bpack.shape, lambda i: (0, 0)),
    ]
    out_specs = pl.BlockSpec((None, BB, 128), lambda i: (i, 0, 0))

    # Advisory cost estimate for XLA scheduling around the custom call.
    flops = B * (4 * Ltot * Dp * Dp          # mlp_f (2 layers)
                 + 4 * L1 * L2 * Dp          # score1 + score2
                 + 4 * L1 * L2 * Dp          # att1 + att2
                 + 6 * Ltot * Dp * Dp        # mlp_g (split layer 1 + layer 2)
                 + 6 * Dp * Dp               # mlp_h
                 + 2 * Dp * 128)             # final linear
    transcendentals = B * (2 * L1 * L2 + 128)
    bytes_accessed = (Bp * Ltot * Dp * e_all.dtype.itemsize
                      + wpack.size * wpack.dtype.itemsize
                      + bpack.size * bpack.dtype.itemsize
                      + Bp * 128 * 4)

    out = pl.pallas_call(
        _make_kernel(L1, L2),
        grid=(NB,),
        in_specs=in_specs,
        out_specs=out_specs,
        out_shape=jax.ShapeDtypeStruct((NB, BB, 128), jnp.float32),
        scratch_shapes=[pltpu.VMEM((BB, Ltot, Dp), jnp.float32)],
        compiler_params=pltpu.CompilerParams(
            dimension_semantics=("parallel",)),               # megacore batch split
        cost_estimate=pl.CostEstimate(flops=int(flops),
                                      transcendentals=int(transcendentals),
                                      bytes_accessed=int(bytes_accessed)),
    )(e_all, wpack, bpack)

    return out.reshape(Bp, 128)[:B, :2]                      # (B, 2) f32 log-probs


# ---------------------------------------------------------------------------
# Parameter prep: pad to lane-dense 128, split 2D-input weights, pack slabs.
# ---------------------------------------------------------------------------
def prepare_kernel_params(p, dp=DP):
    D = p['wf1'].shape[0]
    assert D <= dp and p['wfin'].shape[1] <= dp

    def pad2(x, rows, cols, value=0.0):
        return jnp.pad(x, ((0, rows - x.shape[0]), (0, cols - x.shape[1])),
                       constant_values=value)

    def w(x):
        return pad2(x, dp, dp)

    wpack = jnp.stack([
        w(p['wf1']), w(p['wf2']),
        w(p['wg1'][:D]), w(p['wg1'][D:]), w(p['wg2']),
        w(p['wh1'][:D]), w(p['wh1'][D:]), w(p['wh2']),
        pad2(p['wfin'], dp, dp),                  # (D, 2) -> (dp, 128)
    ]).astype(jnp.bfloat16)                       # (9, dp, dp)

    bpack = jnp.concatenate([
        pad2(p['bf1'], 1, dp), pad2(p['bf2'], 1, dp),
        pad2(p['bg1'], 1, dp), pad2(p['bg2'], 1, dp),
        pad2(p['bh1'], 1, dp), pad2(p['bh2'], 1, dp),
        # Padded logit lanes get -1e9 so the in-kernel log_softmax ignores them.
        pad2(p['bfin'], 1, dp, value=NEG_INF),
        jnp.zeros((1, dp), jnp.float32),
    ], axis=0).astype(jnp.float32)                # (8, dp)

    return {
        'embed': pad2(p['embed'], p['embed'].shape[0], dp).astype(jnp.bfloat16),
        'wpack': wpack,
        'bpack': bpack,
    }


# ---------------------------------------------------------------------------
# Pure-JAX f32 reference (same math, unpadded params) for correctness checking.
# ---------------------------------------------------------------------------
def reference_forward(ids1, ids2, p):
    e1 = p['embed'][ids1].astype(jnp.float32)
    e2 = p['embed'][ids2].astype(jnp.float32)
    B, L1, D = e1.shape
    L2 = e2.shape[1]

    def mlp(x, w1, b1, w2, b2):
        h = jnp.maximum(x @ w1 + b1, 0.0)
        return jnp.maximum(h @ w2 + b2, 0.0)

    f1 = mlp(e1.reshape(-1, D), p['wf1'], p['bf1'], p['wf2'], p['bf2']).reshape(B, L1, D)
    f2 = mlp(e2.reshape(-1, D), p['wf1'], p['bf1'], p['wf2'], p['bf2']).reshape(B, L2, D)
    score1 = jnp.einsum('bid,bjd->bij', f1, f2)
    prob1 = jax.nn.softmax(score1, axis=-1)
    prob2 = jax.nn.softmax(jnp.swapaxes(score1, 1, 2), axis=-1)
    c1 = jnp.concatenate([e1, jnp.einsum('bij,bjd->bid', prob1, e2)], -1).reshape(-1, 2 * D)
    c2 = jnp.concatenate([e2, jnp.einsum('bji,bid->bjd', prob2, e1)], -1).reshape(-1, 2 * D)
    g1 = mlp(c1, p['wg1'], p['bg1'], p['wg2'], p['bg2']).reshape(B, L1, D)
    g2 = mlp(c2, p['wg1'], p['bg1'], p['wg2'], p['bg2']).reshape(B, L2, D)
    comb = jnp.concatenate([jnp.sum(g1, 1), jnp.sum(g2, 1)], -1)
    h = mlp(comb, p['wh1'], p['bh1'], p['wh2'], p['bh2'])
    logits = h @ p['wfin'] + p['bfin']
    return jax.nn.log_softmax(logits, axis=-1)


# ---------------------------------------------------------------------------
# Deterministic parameter construction + demo.
# ---------------------------------------------------------------------------
def make_params(key, vocab, d):
    ks = jax.random.split(key, 16)
    scale = 0.1

    def lin(k, fan_in, fan_out):
        return scale * jax.random.normal(k, (fan_in, fan_out), jnp.float32)

    def bias(k, fan_out):
        return scale * jax.random.normal(k, (1, fan_out), jnp.float32)

    return {
        'embed': scale * jax.random.normal(ks[0], (vocab, d), jnp.float32),
        'wf1': lin(ks[1], d, d),          'bf1': bias(ks[2], d),
        'wf2': lin(ks[3], d, d),          'bf2': bias(ks[4], d),
        'wg1': lin(ks[5], 2 * d, d),      'bg1': bias(ks[6], d),
        'wg2': lin(ks[7], d, d),          'bg2': bias(ks[8], d),
        'wh1': lin(ks[9], 2 * d, d),      'bh1': bias(ks[10], d),
        'wh2': lin(ks[11], d, d),         'bh2': bias(ks[12], d),
        'wfin': lin(ks[13], d, 2),        'bfin': bias(ks[14], 2),
    }


if __name__ == "__main__":
    B, L1, L2, D, V = 2, 8, 8, 32, 50

    key = jax.random.PRNGKey(0)
    k_par, k_id1, k_id2, k_id3, k_id4 = jax.random.split(key, 5)
    params = make_params(k_par, V, D)
    kparams = prepare_kernel_params(params)

    ids1 = jax.random.randint(k_id1, (B, L1), 0, V, dtype=jnp.int32)
    ids2 = jax.random.randint(k_id2, (B, L2), 0, V, dtype=jnp.int32)

    fwd = jax.jit(decomposable_attention, static_argnames=("block_b",))

    out = jax.block_until_ready(fwd(ids1, ids2, kparams))
    ref = jax.block_until_ready(reference_forward(ids1, ids2, params))
    assert out.shape == (B, 2) and out.dtype == jnp.float32
    # bf16 MXU operands + approx reciprocal -> compare with relaxed tolerance.
    assert jnp.allclose(out, ref, rtol=2e-2, atol=2e-2), (out, ref)

    # Also exercise the multi-block (grid > 1) + batch-padding path.
    B2 = 5
    ids1b = jax.random.randint(k_id3, (B2, L1), 0, V, dtype=jnp.int32)
    ids2b = jax.random.randint(k_id4, (B2, L2), 0, V, dtype=jnp.int32)
    out2 = jax.block_until_ready(fwd(ids1b, ids2b, kparams, block_b=2))
    ref2 = jax.block_until_ready(reference_forward(ids1b, ids2b, params))
    assert out2.shape == (B2, 2)
    assert jnp.allclose(out2, ref2, rtol=2e-2, atol=2e-2), (out2, ref2)

    print("KERNEL_OK")
</pallas_src>

<mosaic_0001>
module attributes {stable_mosaic.version = 11 : i64} {
  func.func @kernel(%arg0: i32, %arg1: memref<2x16x128xbf16, #tpu.memory_space<vmem>>, %arg2: memref<9x128x128xbf16, #tpu.memory_space<vmem>>, %arg3: memref<8x128xf32, #tpu.memory_space<vmem>>, %arg4: memref<1x2x128xf32, #tpu.memory_space<vmem>>, %arg5: memref<2x16x128xf32, #tpu.memory_space<vmem>>) attributes {dimension_semantics = [#tpu.dimension_semantics<parallel>], iteration_bounds = array<i64: 1>, scalar_prefetch = 0 : i64, scratch_operands = 1 : i64, tpu.core_type = #tpu.core_type<tc>, window_params = [{transform_indices = @transform_0, window_bounds = array<i64: 2, 16, 128>}, {pipeline_mode = #tpu.pipeline_mode<synchronous>, transform_indices = @transform_1, window_bounds = array<i64: 9, 128, 128>}, {pipeline_mode = #tpu.pipeline_mode<synchronous>, transform_indices = @transform_2, window_bounds = array<i64: 8, 128>}, {transform_indices = @transform_3, window_bounds = array<i64: 1, 2, 128>}]} {
    %c0 = arith.constant 0 : index
    %c0_0 = arith.constant 0 : index
    %0 = vector.load %arg3[%c0, %c0_0] : memref<8x128xf32, #tpu.memory_space<vmem>>, vector<8x128xf32>
    %1 = vector.extract_strided_slice %0 {offsets = [0, 0], sizes = [1, 128], strides = [1, 1]} : vector<8x128xf32> to vector<1x128xf32>
    %2 = vector.extract_strided_slice %0 {offsets = [1, 0], sizes = [1, 128], strides = [1, 1]} : vector<8x128xf32> to vector<1x128xf32>
    %3 = vector.extract_strided_slice %0 {offsets = [2, 0], sizes = [1, 128], strides = [1, 1]} : vector<8x128xf32> to vector<1x128xf32>
    %4 = vector.extract_strided_slice %0 {offsets = [3, 0], sizes = [1, 128], strides = [1, 1]} : vector<8x128xf32> to vector<1x128xf32>
    %5 = vector.extract_strided_slice %0 {offsets = [4, 0], sizes = [1, 128], strides = [1, 1]} : vector<8x128xf32> to vector<1x128xf32>
    %6 = vector.extract_strided_slice %0 {offsets = [5, 0], sizes = [1, 128], strides = [1, 1]} : vector<8x128xf32> to vector<1x128xf32>
    %7 = vector.extract_strided_slice %0 {offsets = [6, 0], sizes = [1, 128], strides = [1, 1]} : vector<8x128xf32> to vector<1x128xf32>
    %c0_1 = arith.constant 0 : index
    %c0_2 = arith.constant 0 : index
    %c0_3 = arith.constant 0 : index
    %8 = vector.load %arg1[%c0_1, %c0_2, %c0_3] : memref<2x16x128xbf16, #tpu.memory_space<vmem>>, vector<2x16x128xbf16>
    %9 = vector.shape_cast %8 : vector<2x16x128xbf16> to vector<32x128xbf16>
    %c0_4 = arith.constant 0 : index
    %c0_5 = arith.constant 0 : index
    %c0_6 = arith.constant 0 : index
    %10 = vector.load %arg2[%c0_4, %c0_5, %c0_6] : memref<9x128x128xbf16, #tpu.memory_space<vmem>>, vector<1x128x128xbf16>
    %11 = vector.shape_cast %10 : vector<1x128x128xbf16> to vector<128x128xbf16>
    %cst = arith.constant dense<0.000000e+00> : vector<32x128xf32>
    %12 = tpu.matmul %9, %11, %cst {dimension_numbers = #tpu.dot_dimension_numbers<[1], [0], [0], [1], [0, 0, 1, 1], [], []>} : vector<32x128xbf16>, vector<128x128xbf16>, vector<32x128xf32> -> vector<32x128xf32>
    %13 = vector.broadcast %1 : vector<1x128xf32> to vector<32x128xf32>
    %14 = arith.addf %12, %13 : vector<32x128xf32>
    %cst_7 = arith.constant 0.000000e+00 : f32
    %15 = vector.broadcast %cst_7 : f32 to vector<32x128xf32>
    %16 = arith.maximumf %14, %15 : vector<32x128xf32>
    %17 = arith.truncf %16 : vector<32x128xf32> to vector<32x128xbf16>
    %c1 = arith.constant 1 : index
    %c0_8 = arith.constant 0 : index
    %c0_9 = arith.constant 0 : index
    %18 = vector.load %arg2[%c1, %c0_8, %c0_9] : memref<9x128x128xbf16, #tpu.memory_space<vmem>>, vector<1x128x128xbf16>
    %19 = vector.shape_cast %18 : vector<1x128x128xbf16> to vector<128x128xbf16>
    %cst_10 = arith.constant dense<0.000000e+00> : vector<32x128xf32>
    %20 = tpu.matmul %17, %19, %cst_10 {dimension_numbers = #tpu.dot_dimension_numbers<[1], [0], [0], [1], [0, 0, 1, 1], [], []>} : vector<32x128xbf16>, vector<128x128xbf16>, vector<32x128xf32> -> vector<32x128xf32>
    %21 = vector.broadcast %2 : vector<1x128xf32> to vector<32x128xf32>
    %22 = arith.addf %20, %21 : vector<32x128xf32>
    %cst_11 = arith.constant 0.000000e+00 : f32
    %23 = vector.broadcast %cst_11 : f32 to vector<32x128xf32>
    %24 = arith.maximumf %22, %23 : vector<32x128xf32>
    %25 = vector.shape_cast %24 : vector<32x128xf32> to vector<2x16x128xf32>
    %26 = vector.extract_strided_slice %25 {offsets = [0, 0, 0], sizes = [2, 8, 128], strides = [1, 1, 1]} : vector<2x16x128xf32> to vector<2x8x128xf32>
    %27 = arith.truncf %26 : vector<2x8x128xf32> to vector<2x8x128xbf16>
    %28 = vector.extract_strided_slice %25 {offsets = [0, 8, 0], sizes = [2, 8, 128], strides = [1, 1, 1]} : vector<2x16x128xf32> to vector<2x8x128xf32>
    %29 = arith.truncf %28 : vector<2x8x128xf32> to vector<2x8x128xbf16>
    "tpu.trace_start"() <{level = 10 : i32, message = "bqd,bkd->bqk"}> : () -> ()
    %cst_12 = arith.constant dense<0.000000e+00> : vector<2x8x8xf32>
    %30 = tpu.matmul %27, %29, %cst_12 {dimension_numbers = #tpu.dot_dimension_numbers<[2], [2], [1], [1], [0, 0, 0, 1, 1, 1], [0], [0]>} : vector<2x8x128xbf16>, vector<2x8x128xbf16>, vector<2x8x8xf32> -> vector<2x8x8xf32>
    "tpu.trace_stop"() : () -> ()
    "tpu.trace_start"() <{level = 10 : i32, message = "bkd,bqd->bkq"}> : () -> ()
    %cst_13 = arith.constant dense<0.000000e+00> : vector<2x8x8xf32>
    %31 = tpu.matmul %29, %27, %cst_13 {dimension_numbers = #tpu.dot_dimension_numbers<[2], [2], [1], [1], [0, 0, 0, 1, 1, 1], [0], [0]>} : vector<2x8x128xbf16>, vector<2x8x128xbf16>, vector<2x8x8xf32> -> vector<2x8x8xf32>
    "tpu.trace_stop"() : () -> ()
    %cst_14 = arith.constant dense<0xFF800000> : vector<2x8xf32>
    %32 = vector.multi_reduction <maximumf>, %30, %cst_14 [2] : vector<2x8x8xf32> to vector<2x8xf32>
    %33 = vector.shape_cast %32 : vector<2x8xf32> to vector<2x8x1xf32>
    %34 = vector.broadcast %33 : vector<2x8x1xf32> to vector<2x8x8xf32>
    %35 = arith.subf %30, %34 : vector<2x8x8xf32>
    %36 = math.exp %35 : vector<2x8x8xf32>
    %cst_15 = arith.constant dense<0.000000e+00> : vector<2x8xf32>
    %37 = vector.multi_reduction <add>, %36, %cst_15 [2] : vector<2x8x8xf32> to vector<2x8xf32>
    %38 = vector.shape_cast %37 : vector<2x8xf32> to vector<2x8x1xf32>
    %39 = tpu.reciprocal %38 {approx = true} : vector<2x8x1xf32> -> vector<2x8x1xf32>
    %40 = vector.broadcast %39 : vector<2x8x1xf32> to vector<2x8x8xf32>
    %41 = arith.mulf %36, %40 : vector<2x8x8xf32>
    %cst_16 = arith.constant dense<0xFF800000> : vector<2x8xf32>
    %42 = vector.multi_reduction <maximumf>, %31, %cst_16 [2] : vector<2x8x8xf32> to vector<2x8xf32>
    %43 = vector.shape_cast %42 : vector<2x8xf32> to vector<2x8x1xf32>
    %44 = vector.broadcast %43 : vector<2x8x1xf32> to vector<2x8x8xf32>
    %45 = arith.subf %31, %44 : vector<2x8x8xf32>
    %46 = math.exp %45 : vector<2x8x8xf32>
    %cst_17 = arith.constant dense<0.000000e+00> : vector<2x8xf32>
    %47 = vector.multi_reduction <add>, %46, %cst_17 [2] : vector<2x8x8xf32> to vector<2x8xf32>
    %48 = vector.shape_cast %47 : vector<2x8xf32> to vector<2x8x1xf32>
    %49 = tpu.reciprocal %48 {approx = true} : vector<2x8x1xf32> -> vector<2x8x1xf32>
    %50 = vector.broadcast %49 : vector<2x8x1xf32> to vector<2x8x8xf32>
    %51 = arith.mulf %46, %50 : vector<2x8x8xf32>
    %52 = vector.extract_strided_slice %8 {offsets = [0, 0, 0], sizes = [2, 8, 128], strides = [1, 1, 1]} : vector<2x16x128xbf16> to vector<2x8x128xbf16>
    %53 = vector.extract_strided_slice %8 {offsets = [0, 8, 0], sizes = [2, 8, 128], strides = [1, 1, 1]} : vector<2x16x128xbf16> to vector<2x8x128xbf16>
    %54 = arith.truncf %41 : vector<2x8x8xf32> to vector<2x8x8xbf16>
    "tpu.trace_start"() <{level = 10 : i32, message = "bqk,bkd->bqd"}> : () -> ()
    %cst_18 = arith.constant dense<0.000000e+00> : vector<2x8x128xf32>
    %55 = tpu.matmul %54, %53, %cst_18 {dimension_numbers = #tpu.dot_dimension_numbers<[2], [1], [1], [2], [0, 0, 0, 1, 1, 2], [0], [0]>} : vector<2x8x8xbf16>, vector<2x8x128xbf16>, vector<2x8x128xf32> -> vector<2x8x128xf32>
    "tpu.trace_stop"() : () -> ()
    %56 = arith.truncf %51 : vector<2x8x8xf32> to vector<2x8x8xbf16>
    "tpu.trace_start"() <{level = 10 : i32, message = "bkq,bqd->bkd"}> : () -> ()
    %cst_19 = arith.constant dense<0.000000e+00> : vector<2x8x128xf32>
    %57 = tpu.matmul %56, %52, %cst_19 {dimension_numbers = #tpu.dot_dimension_numbers<[2], [1], [1], [2], [0, 0, 0, 1, 1, 2], [0], [0]>} : vector<2x8x8xbf16>, vector<2x8x128xbf16>, vector<2x8x128xf32> -> vector<2x8x128xf32>
    "tpu.trace_stop"() : () -> ()
    %c0_20 = arith.constant 0 : index
    %c0_21 = arith.constant 0 : index
    %c0_22 = arith.constant 0 : index
    %58 = vector.load %arg5[%c0_20, %c0_21, %c0_22] : memref<2x16x128xf32, #tpu.memory_space<vmem>>, vector<2x8x128xf32>
    tpu.vector_store %arg5[%c0_20, %c0_21, %c0_22], %55 {strides = array<i32>} : memref<2x16x128xf32, #tpu.memory_space<vmem>>, vector<2x8x128xf32>,
    %c0_23 = arith.constant 0 : index
    %c8 = arith.constant 8 : index
    %c0_24 = arith.constant 0 : index
    %59 = vector.load %arg5[%c0_23, %c8, %c0_24] : memref<2x16x128xf32, #tpu.memory_space<vmem>>, vector<2x8x128xf32>
    tpu.vector_store %arg5[%c0_23, %c8, %c0_24], %57 {strides = array<i32>} : memref<2x16x128xf32, #tpu.memory_space<vmem>>, vector<2x8x128xf32>,
    %c0_25 = arith.constant 0 : index
    %c0_26 = arith.constant 0 : index
    %c0_27 = arith.constant 0 : index
    %60 = vector.load %arg5[%c0_25, %c0_26, %c0_27] : memref<2x16x128xf32, #tpu.memory_space<vmem>>, vector<2x16x128xf32>
    %61 = vector.shape_cast %60 : vector<2x16x128xf32> to vector<32x128xf32>
    %62 = arith.truncf %61 : vector<32x128xf32> to vector<32x128xbf16>
    %c2 = arith.constant 2 : index
    %c0_28 = arith.constant 0 : index
    %c0_29 = arith.constant 0 : index
    %63 = vector.load %arg2[%c2, %c0_28, %c0_29] : memref<9x128x128xbf16, #tpu.memory_space<vmem>>, vector<1x128x128xbf16>
    %64 = vector.shape_cast %63 : vector<1x128x128xbf16> to vector<128x128xbf16>
    %cst_30 = arith.constant dense<0.000000e+00> : vector<32x128xf32>
    %65 = tpu.matmul %9, %64, %cst_30 {dimension_numbers = #tpu.dot_dimension_numbers<[1], [0], [0], [1], [0, 0, 1, 1], [], []>} : vector<32x128xbf16>, vector<128x128xbf16>, vector<32x128xf32> -> vector<32x128xf32>
    %c3 = arith.constant 3 : index
    %c0_31 = arith.constant 0 : index
    %c0_32 = arith.constant 0 : index
    %66 = vector.load %arg2[%c3, %c0_31, %c0_32] : memref<9x128x128xbf16, #tpu.memory_space<vmem>>, vector<1x128x128xbf16>
    %67 = vector.shape_cast %66 : vector<1x128x128xbf16> to vector<128x128xbf16>
    %cst_33 = arith.constant dense<0.000000e+00> : vector<32x128xf32>
    %68 = tpu.matmul %62, %67, %cst_33 {dimension_numbers = #tpu.dot_dimension_numbers<[1], [0], [0], [1], [0, 0, 1, 1], [], []>} : vector<32x128xbf16>, vector<128x128xbf16>, vector<32x128xf32> -> vector<32x128xf32>
    %69 = arith.addf %65, %68 : vector<32x128xf32>
    %70 = vector.broadcast %3 : vector<1x128xf32> to vector<32x128xf32>
    %71 = arith.addf %69, %70 : vector<32x128xf32>
    %cst_34 = arith.constant 0.000000e+00 : f32
    %72 = vector.broadcast %cst_34 : f32 to vector<32x128xf32>
    %73 = arith.maximumf %71, %72 : vector<32x128xf32>
    %74 = arith.truncf %73 : vector<32x128xf32> to vector<32x128xbf16>
    %c4 = arith.constant 4 : index
    %c0_35 = arith.constant 0 : index
    %c0_36 = arith.constant 0 : index
    %75 = vector.load %arg2[%c4, %c0_35, %c0_36] : memref<9x128x128xbf16, #tpu.memory_space<vmem>>, vector<1x128x128xbf16>
    %76 = vector.shape_cast %75 : vector<1x128x128xbf16> to vector<128x128xbf16>
    %cst_37 = arith.constant dense<0.000000e+00> : vector<32x128xf32>
    %77 = tpu.matmul %74, %76, %cst_37 {dimension_numbers = #tpu.dot_dimension_numbers<[1], [0], [0], [1], [0, 0, 1, 1], [], []>} : vector<32x128xbf16>, vector<128x128xbf16>, vector<32x128xf32> -> vector<32x128xf32>
    %78 = vector.broadcast %4 : vector<1x128xf32> to vector<32x128xf32>
    %79 = arith.addf %77, %78 : vector<32x128xf32>
    %cst_38 = arith.constant 0.000000e+00 : f32
    %80 = vector.broadcast %cst_38 : f32 to vector<32x128xf32>
    %81 = arith.maximumf %79, %80 : vector<32x128xf32>
    %82 = vector.shape_cast %81 : vector<32x128xf32> to vector<2x16x128xf32>
    %83 = vector.extract_strided_slice %82 {offsets = [0, 0, 0], sizes = [2, 8, 128], strides = [1, 1, 1]} : vector<2x16x128xf32> to vector<2x8x128xf32>
    %cst_39 = arith.constant dense<0.000000e+00> : vector<2x128xf32>
    %84 = vector.multi_reduction <add>, %83, %cst_39 [1] : vector<2x8x128xf32> to vector<2x128xf32>
    %85 = vector.extract_strided_slice %82 {offsets = [0, 8, 0], sizes = [2, 8, 128], strides = [1, 1, 1]} : vector<2x16x128xf32> to vector<2x8x128xf32>
    %cst_40 = arith.constant dense<0.000000e+00> : vector<2x128xf32>
    %86 = vector.multi_reduction <add>, %85, %cst_40 [1] : vector<2x8x128xf32> to vector<2x128xf32>
    %87 = arith.truncf %84 : vector<2x128xf32> to vector<2x128xbf16>
    %c5 = arith.constant 5 : index
    %c0_41 = arith.constant 0 : index
    %c0_42 = arith.constant 0 : index
    %88 = vector.load %arg2[%c5, %c0_41, %c0_42] : memref<9x128x128xbf16, #tpu.memory_space<vmem>>, vector<1x128x128xbf16>
    %89 = vector.shape_cast %88 : vector<1x128x128xbf16> to vector<128x128xbf16>
    %cst_43 = arith.constant dense<0.000000e+00> : vector<2x128xf32>
    %90 = tpu.matmul %87, %89, %cst_43 {dimension_numbers = #tpu.dot_dimension_numbers<[1], [0], [0], [1], [0, 0, 1, 1], [], []>} : vector<2x128xbf16>, vector<128x128xbf16>, vector<2x128xf32> -> vector<2x128xf32>
    %91 = arith.truncf %86 : vector<2x128xf32> to vector<2x128xbf16>
    %c6 = arith.constant 6 : index
    %c0_44 = arith.constant 0 : index
    %c0_45 = arith.constant 0 : index
    %92 = vector.load %arg2[%c6, %c0_44, %c0_45] : memref<9x128x128xbf16, #tpu.memory_space<vmem>>, vector<1x128x128xbf16>
    %93 = vector.shape_cast %92 : vector<1x128x128xbf16> to vector<128x128xbf16>
    %cst_46 = arith.constant dense<0.000000e+00> : vector<2x128xf32>
    %94 = tpu.matmul %91, %93, %cst_46 {dimension_numbers = #tpu.dot_dimension_numbers<[1], [0], [0], [1], [0, 0, 1, 1], [], []>} : vector<2x128xbf16>, vector<128x128xbf16>, vector<2x128xf32> -> vector<2x128xf32>
    %95 = arith.addf %90, %94 : vector<2x128xf32>
    %96 = vector.broadcast %5 : vector<1x128xf32> to vector<2x128xf32>
    %97 = arith.addf %95, %96 : vector<2x128xf32>
    %cst_47 = arith.constant 0.000000e+00 : f32
    %98 = vector.broadcast %cst_47 : f32 to vector<2x128xf32>
    %99 = arith.maximumf %97, %98 : vector<2x128xf32>
    %100 = arith.truncf %99 : vector<2x128xf32> to vector<2x128xbf16>
    %c7 = arith.constant 7 : index
    %c0_48 = arith.constant 0 : index
    %c0_49 = arith.constant 0 : index
    %101 = vector.load %arg2[%c7, %c0_48, %c0_49] : memref<9x128x128xbf16, #tpu.memory_space<vmem>>, vector<1x128x128xbf16>
    %102 = vector.shape_cast %101 : vector<1x128x128xbf16> to vector<128x128xbf16>
    %cst_50 = arith.constant dense<0.000000e+00> : vector<2x128xf32>
    %103 = tpu.matmul %100, %102, %cst_50 {dimension_numbers = #tpu.dot_dimension_numbers<[1], [0], [0], [1], [0, 0, 1, 1], [], []>} : vector<2x128xbf16>, vector<128x128xbf16>, vector<2x128xf32> -> vector<2x128xf32>
    %104 = vector.broadcast %6 : vector<1x128xf32> to vector<2x128xf32>
    %105 = arith.addf %103, %104 : vector<2x128xf32>
    %cst_51 = arith.constant 0.000000e+00 : f32
    %106 = vector.broadcast %cst_51 : f32 to vector<2x128xf32>
    %107 = arith.maximumf %105, %106 : vector<2x128xf32>
    %108 = arith.truncf %107 : vector<2x128xf32> to vector<2x128xbf16>
    %c8_52 = arith.constant 8 : index
    %c0_53 = arith.constant 0 : index
    %c0_54 = arith.constant 0 : index
    %109 = vector.load %arg2[%c8_52, %c0_53, %c0_54] : memref<9x128x128xbf16, #tpu.memory_space<vmem>>, vector<1x128x128xbf16>
    %110 = vector.shape_cast %109 : vector<1x128x128xbf16> to vector<128x128xbf16>
    %cst_55 = arith.constant dense<0.000000e+00> : vector<2x128xf32>
    %111 = tpu.matmul %108, %110, %cst_55 {dimension_numbers = #tpu.dot_dimension_numbers<[1], [0], [0], [1], [0, 0, 1, 1], [], []>} : vector<2x128xbf16>, vector<128x128xbf16>, vector<2x128xf32> -> vector<2x128xf32>
    %112 = vector.broadcast %7 : vector<1x128xf32> to vector<2x128xf32>
    %113 = arith.addf %111, %112 : vector<2x128xf32>
    %cst_56 = arith.constant dense<0xFF800000> : vector<2xf32>
    %114 = vector.multi_reduction <maximumf>, %113, %cst_56 [1] : vector<2x128xf32> to vector<2xf32>
    %115 = vector.shape_cast %114 : vector<2xf32> to vector<2x1xf32>
    %116 = vector.broadcast %115 : vector<2x1xf32> to vector<2x128xf32>
    %117 = arith.subf %113, %116 : vector<2x128xf32>
    %118 = math.exp %117 : vector<2x128xf32>
    %cst_57 = arith.constant dense<0.000000e+00> : vector<2xf32>
    %119 = vector.multi_reduction <add>, %118, %cst_57 [1] : vector<2x128xf32> to vector<2xf32>
    %120 = vector.shape_cast %119 : vector<2xf32> to vector<2x1xf32>
    %121 = math.log %120 : vector<2x1xf32>
    %122 = arith.addf %115, %121 : vector<2x1xf32>
    %123 = vector.broadcast %122 : vector<2x1xf32> to vector<2x128xf32>
    %124 = arith.subf %113, %123 : vector<2x128xf32>
    %c0_58 = arith.constant 0 : index
    %c0_59 = arith.constant 0 : index
    %c0_60 = arith.constant 0 : index
    %125 = vector.load %arg4[%c0_58, %c0_59, %c0_60] : memref<1x2x128xf32, #tpu.memory_space<vmem>>, vector<1x2x128xf32>
    %126 = vector.shape_cast %125 : vector<1x2x128xf32> to vector<2x128xf32>
    %127 = vector.shape_cast %124 : vector<2x128xf32> to vector<1x2x128xf32>
    tpu.vector_store %arg4[%c0_58, %c0_59, %c0_60], %127 {strides = array<i32>} : memref<1x2x128xf32, #tpu.memory_space<vmem>>, vector<1x2x128xf32>,
    return
  }
  func.func @transform_0(%arg0: i32) -> (i32, i32, i32) {
    %c0_i32 = arith.constant 0 : i32
    %c0_i32_0 = arith.constant 0 : i32
    %c0_i32_1 = arith.constant 0 : i32
    return %arg0, %c0_i32, %c0_i32_0 : i32, i32, i32
  }
  func.func @transform_1(%arg0: i32) -> (i32, i32, i32) {
    %c0_i32 = arith.constant 0 : i32
    %c0_i32_0 = arith.constant 0 : i32
    %c0_i32_1 = arith.constant 0 : i32
    %c0_i32_2 = arith.constant 0 : i32
    return %c0_i32, %c0_i32_0, %c0_i32_1 : i32, i32, i32
  }
  func.func @transform_2(%arg0: i32) -> (i32, i32) {
    %c0_i32 = arith.constant 0 : i32
    %c0_i32_0 = arith.constant 0 : i32
    %c0_i32_1 = arith.constant 0 : i32
    return %c0_i32, %c0_i32_0 : i32, i32
  }
  func.func @transform_3(%arg0: i32) -> (i32, i32, i32) {
    %c0_i32 = arith.constant 0 : i32
    %c0_i32_0 = arith.constant 0 : i32
    %c0_i32_1 = arith.constant 0 : i32
    return %arg0, %c0_i32, %c0_i32_0 : i32, i32, i32
  }
}

</mosaic_0001>

<llo_original>
// kernel: decomposable_attention.1
$region0: #{decomposable_attention.1}
  #allocation0 [shape = 'u32[]', space=smem, size = 0x4, offset = 0x4, fixed_abs, tag = 'smem constant byte address 0x4 - core index']
  #allocation1 [shape = 'u32[144,128]{1,0:T(1,128)}', space=vmem, size = 0x12000, scoped, tag = 'internal scratch']
  #allocation2 [shape = 'f32[2,16,128]{2,1,0:T(8,128)}', space=vmem, size = 0x4000, scoped, tag = 'scratch operand']
  %s0 = inlined_call_operand.vmem [shape: bf16[2,16,128], index: 0, kind: input, shape index: {}]
  %s1 = inlined_call_operand.hbm [shape: bf16[9,128,128], index: 1, kind: input, shape index: {}]
  %s2 = inlined_call_operand.vmem [shape: f32[8,128], index: 2, kind: input, shape index: {}]
  %s3 = inlined_call_operand.hbm [shape: f32[1,2,128], index: 3, kind: output, shape index: {}]
  %s4 = sld [smem:[#allocation0]]
  $region26: #{decomposable_attention.1} parent=0
    _
  %s6 = ssub.s32 1, %s4
  %s7 = scalar_select 0, %s6, %s4
  $region1: #{decomposable_attention.1} parent=0
    #allocation3 [shape = 'u8[294912]{0}', space=vmem, size = 0x48000, scoped, tag = 'input window, operand 1, single buffered']
    #allocation4 [shape = 's32[1]{0}', space=sflag, size = 0x4, scoped, tag = 'scoped memory for decomposable_attention.1']
    #allocation5 [shape = 's32[1]{0}', space=sflag, size = 0x4, scoped, tag = 'scoped memory for decomposable_attention.1']
    #allocation6 [shape = 'u8[1024]{0}', space=vmem, size = 0x400, scoped, tag = 'output window, operand 0, single buffered']
    %8 = vsyncpa [#allocation4], 0
    %9 = vsyncpa [#allocation5], 0
    // Predicated region
    $region2: #{decomposable_attention.1} parent=1 // pred_check
      _
    $region3: #{decomposable_attention.1} parent=1 // pred_check_branch
      %11 = sbr.rel (0) target = $region5
    $region4: #{decomposable_attention.1} parent=1 // pred_region
      _
    $region5: #{decomposable_attention.1} parent=1 // pred_fallthru
      _
    // Predicated region
    $region6: #{decomposable_attention.1} parent=1 // pred_check
      _
    $region7: #{decomposable_attention.1} parent=1 // pred_check_branch
      %13 = sbr.rel (0) target = $region9
    $region8: #{decomposable_attention.1} parent=1 // pred_region
      %s15 = ssub.s32 9216, 9216
      %16 = vsyncadd [#allocation4], %s15
      %s17 = sshll.u32 [#allocation3], 4
      %s18 = int_to_ptr.vmem [resolvable:$true] %s17
      %23 = dma.hbm_to_vmem [thread:$0]  %s1, 9216, %s18, [#allocation4], 64, 64, 4
    $region9: #{decomposable_attention.1} parent=1 // pred_fallthru
      _
    // Predicated region
    $region10: #{decomposable_attention.1} parent=1 // pred_check
      _
    $region11: #{decomposable_attention.1} parent=1 // pred_check_branch
      %25 = sbr.rel (0) target = $region13
    $region12: #{decomposable_attention.1} parent=1 // pred_region
      _
    $region13: #{decomposable_attention.1} parent=1 // pred_fallthru
      _
    // Predicated region
    $region14: #{decomposable_attention.1} parent=1 // pred_check
      _
    $region15: #{decomposable_attention.1} parent=1 // pred_check_branch
      %27 = sbr.rel (0) target = $region17
    $region16: #{decomposable_attention.1} parent=1 // pred_region
      %28 = dma.done [#allocation4], 9216
    $region17: #{decomposable_attention.1} parent=1 // pred_fallthru
      _
    %v30 = vld [vmem:[%s2] sm:$0xff]
    %v31 = vld [vmem:[%s0] sm:$0xf]
    %v32 = vld [vmem:[%s0 + $0x4] sm:$0xf]
    %v33 = vld [vmem:[%s0 + $0x8] sm:$0xf]
    %v34 = vld [vmem:[%s0 + $0xc] sm:$0xf]
    %v35 = vld [vmem:[#allocation3] sm:$0xf]
    %v36 = vld [vmem:[#allocation3 + $0x4] sm:$0xf]
    %v37 = vld [vmem:[#allocation3 + $0x8] sm:$0xf]
    %v38 = vld [vmem:[#allocation3 + $0xc] sm:$0xf]
    %v39 = vld [vmem:[#allocation3 + $0x10] sm:$0xf]
    %v40 = vld [vmem:[#allocation3 + $0x14] sm:$0xf]
    %v41 = vld [vmem:[#allocation3 + $0x18] sm:$0xf]
    %v42 = vld [vmem:[#allocation3 + $0x1c] sm:$0xf]
    %v43 = vld [vmem:[#allocation3 + $0x20] sm:$0xf]
    %v44 = vld [vmem:[#allocation3 + $0x24] sm:$0xf]
    %v45 = vld [vmem:[#allocation3 + $0x28] sm:$0xf]
    %v46 = vld [vmem:[#allocation3 + $0x2c] sm:$0xf]
    %v47 = vld [vmem:[#allocation3 + $0x30] sm:$0xf]
    %v48 = vld [vmem:[#allocation3 + $0x34] sm:$0xf]
    %v49 = vld [vmem:[#allocation3 + $0x38] sm:$0xf]
    %v50 = vld [vmem:[#allocation3 + $0x3c] sm:$0xf]
    %v51 = vlaneseq
    %v52 = vshrl.u32 %v51, 7
    %v53 = vsub.s32 0, %v52
    %v54 = vrot.slane %v30, %v53
    %v59 = vunpack.c.l.b16 %v31
    %v60 = vunpack.c.l.b16 %v32
    %v61 = vunpack.c.l.b16 %v33
    %v62 = vunpack.c.l.b16 %v34
    %v63 = vpack.c.b16 %v60, %v59
    %v64 = vpack.c.b16 %v62, %v61
    %v83 = vunpack.c.l.b16 %v35
    %v84 = vunpack.c.l.b16 %v36
    %v85 = vunpack.c.l.b16 %v37
    %v86 = vunpack.c.l.b16 %v38
    %v87 = vunpack.c.l.b16 %v39
    %v88 = vunpack.c.l.b16 %v40
    %v89 = vunpack.c.l.b16 %v41
    %v90 = vunpack.c.l.b16 %v42
    %v91 = vunpack.c.l.b16 %v43
    %v92 = vunpack.c.l.b16 %v44
    %v93 = vunpack.c.l.b16 %v45
    %v94 = vunpack.c.l.b16 %v46
    %v95 = vunpack.c.l.b16 %v47
    %v96 = vunpack.c.l.b16 %v48
    %v97 = vunpack.c.l.b16 %v49
    %v98 = vunpack.c.l.b16 %v50
    %v99 = vpack.c.b16 %v84, %v83
    %v100 = vpack.c.b16 %v86, %v85
    %v101 = vpack.c.b16 %v88, %v87
    %v102 = vpack.c.b16 %v90, %v89
    %v103 = vpack.c.b16 %v92, %v91
    %v104 = vpack.c.b16 %v94, %v93
    %v105 = vpack.c.b16 %v96, %v95
    %v106 = vpack.c.b16 %v98, %v97
    %115 = vmatprep.subr.bf16.mxu0 0
    %116 = vmatpush1.bf16.msra.mxu0 %v106
    %117 = vmatprep.subr.bf16.mxu0 0
    %118 = vmatpush1.bf16.msra.mxu0 %v105
    %119 = vmatprep.subr.bf16.mxu0 0
    %120 = vmatpush1.bf16.msra.mxu0 %v104
    %121 = vmatprep.subr.bf16.mxu0 0
    %122 = vmatpush1.bf16.msra.mxu0 %v103
    %123 = vmatprep.subr.bf16.mxu0 0
    %124 = vmatpush1.bf16.msra.mxu0 %v102
    %125 = vmatprep.subr.bf16.mxu0 0
    %126 = vmatpush1.bf16.msra.mxu0 %v101
    %127 = vmatprep.subr.bf16.mxu0 0
    %128 = vmatpush1.bf16.msra.mxu0 %v100
    %129 = vmatprep.subr.bf16.mxu0 0
    %130 = vmatpush1.bf16.msra.mxu0 %v99
    %131 = vmatprep.subr.bf16.mxu0 0
    %132 = vmatpush2.bf16.msra.mxu0 0
    %133 = vmatprep.subr.bf16.mxu0 0
    %134 = vmatpush2.bf16.msra.mxu0 0
    %135 = vmatprep.subr.bf16.mxu0 0
    %136 = vmatpush2.bf16.msra.mxu0 0
    %137 = vmatprep.subr.bf16.mxu0 0
    %138 = vmatpush2.bf16.msra.mxu0 0
    %139 = vmatprep.subr.bf16.mxu0 0
    %140 = vmatpush2.bf16.msra.mxu0 0
    %141 = vmatprep.subr.bf16.mxu0 0
    %142 = vmatpush2.bf16.msra.mxu0 0
    %143 = vmatprep.subr.bf16.mxu0 0
    %144 = vmatpush2.bf16.msra.mxu0 0
    %145 = vmatprep.subr.bf16.mxu0 0
    %146 = vmatpush2.bf16.msra.mxu0 0
    %147 = vmatprep.mubr.bf16.mxu0 0
    %148 = vmatmul.mubr.bf16.gmra.mxu0 %v63
    %v149 = vpop.f32.mrf.mxu0
    %v150 = vadd.f32 %v54, %v149
    %v151 = vpop.f32.mrf.mxu0
    %v152 = vpop.f32.mrf.mxu0
    %v153 = vadd.f32 %v54, %v152
    %v154 = vpop.f32.mrf.mxu0
    %155 = vmatprep.mubr.bf16.mxu0 0
    %156 = vmatmul.mubr.bf16.gmra.mxu0 %v64
    %v157 = vpop.f32.mrf.mxu0
    %v158 = vadd.f32 %v54, %v157
    %v159 = vpop.f32.mrf.mxu0
    %v160 = vpop.f32.mrf.mxu0
    %v161 = vadd.f32 %v54, %v160
    %v162 = vpop.f32.mrf.mxu0
    %163 = vdwg.mxu0
    %v164 = vmax.f32 %v150, 0.0
    %v165 = vmax.f32 %v153, 0.0
    %v166 = vmax.f32 %v158, 0.0
    %v167 = vmax.f32 %v161, 0.0
    %v168 = vpack.c.bf16 %v165, %v164
    %v169 = vpack.c.bf16 %v167, %v166
    %s170 = scalar_lea.vmem [#allocation3], 64
    %v171 = vld [vmem:[%s170] sm:$0xf]
    %v172 = vld [vmem:[%s170 + $0x4] sm:$0xf]
    %v173 = vld [vmem:[%s170 + $0x8] sm:$0xf]
    %v174 = vld [vmem:[%s170 + $0xc] sm:$0xf]
    %v175 = vld [vmem:[%s170 + $0x10] sm:$0xf]
    %v176 = vld [vmem:[%s170 + $0x14] sm:$0xf]
    %v177 = vld [vmem:[%s170 + $0x18] sm:$0xf]
    %v178 = vld [vmem:[%s170 + $0x1c] sm:$0xf]
    %v179 = vld [vmem:[%s170 + $0x20] sm:$0xf]
    %v180 = vld [vmem:[%s170 + $0x24] sm:$0xf]
    %v181 = vld [vmem:[%s170 + $0x28] sm:$0xf]
    %v182 = vld [vmem:[%s170 + $0x2c] sm:$0xf]
    %v183 = vld [vmem:[%s170 + $0x30] sm:$0xf]
    %v184 = vld [vmem:[%s170 + $0x34] sm:$0xf]
    %v185 = vld [vmem:[%s170 + $0x38] sm:$0xf]
    %v186 = vld [vmem:[%s170 + $0x3c] sm:$0xf]
    %v187 = vlaneseq
    %v188 = vshrl.u32 %v187, 7
    %v189 = vsub.s32 1, %v188
    %v190 = vrot.slane %v30, %v189
    %v207 = vunpack.c.l.b16 %v171
    %v208 = vunpack.c.l.b16 %v172
    %v209 = vunpack.c.l.b16 %v173
    %v210 = vunpack.c.l.b16 %v174
    %v211 = vunpack.c.l.b16 %v175
    %v212 = vunpack.c.l.b16 %v176
    %v213 = vunpack.c.l.b16 %v177
    %v214 = vunpack.c.l.b16 %v178
    %v215 = vunpack.c.l.b16 %v179
    %v216 = vunpack.c.l.b16 %v180
    %v217 = vunpack.c.l.b16 %v181
    %v218 = vunpack.c.l.b16 %v182
    %v219 = vunpack.c.l.b16 %v183
    %v220 = vunpack.c.l.b16 %v184
    %v221 = vunpack.c.l.b16 %v185
    %v222 = vunpack.c.l.b16 %v186
    %v223 = vpack.c.b16 %v208, %v207
    %v224 = vpack.c.b16 %v210, %v209
    %v225 = vpack.c.b16 %v212, %v211
    %v226 = vpack.c.b16 %v214, %v213
    %v227 = vpack.c.b16 %v216, %v215
    %v228 = vpack.c.b16 %v218, %v217
    %v229 = vpack.c.b16 %v220, %v219
    %v230 = vpack.c.b16 %v222, %v221
    %239 = vmatprep.subr.bf16.mxu0 0
    %240 = vmatpush1.bf16.msra.mxu0 %v230
    %241 = vmatprep.subr.bf16.mxu0 0
    %242 = vmatpush1.bf16.msra.mxu0 %v229
    %243 = vmatprep.subr.bf16.mxu0 0
    %244 = vmatpush1.bf16.msra.mxu0 %v228
    %245 = vmatprep.subr.bf16.mxu0 0
    %246 = vmatpush1.bf16.msra.mxu0 %v227
    %247 = vmatprep.subr.bf16.mxu0 0
    %248 = vmatpush1.bf16.msra.mxu0 %v226
    %249 = vmatprep.subr.bf16.mxu0 0
    %250 = vmatpush1.bf16.msra.mxu0 %v225
    %251 = vmatprep.subr.bf16.mxu0 0
    %252 = vmatpush1.bf16.msra.mxu0 %v224
    %253 = vmatprep.subr.bf16.mxu0 0
    %254 = vmatpush1.bf16.msra.mxu0 %v223
    %255 = vmatprep.subr.bf16.mxu0 0
    %256 = vmatpush2.bf16.msra.mxu0 0
    %257 = vmatprep.subr.bf16.mxu0 0
    %258 = vmatpush2.bf16.msra.mxu0 0
    %259 = vmatprep.subr.bf16.mxu0 0
    %260 = vmatpush2.bf16.msra.mxu0 0
    %261 = vmatprep.subr.bf16.mxu0 0
    %262 = vmatpush2.bf16.msra.mxu0 0
    %263 = vmatprep.subr.bf16.mxu0 0
    %264 = vmatpush2.bf16.msra.mxu0 0
    %265 = vmatprep.subr.bf16.mxu0 0
    %266 = vmatpush2.bf16.msra.mxu0 0
    %267 = vmatprep.subr.bf16.mxu0 0
    %268 = vmatpush2.bf16.msra.mxu0 0
    %269 = vmatprep.subr.bf16.mxu0 0
    %270 = vmatpush2.bf16.msra.mxu0 0
    %271 = vmatprep.mubr.bf16.mxu0 0
    %272 = vmatmul.mubr.bf16.gmra.mxu0 %v168
    %v273 = vpop.f32.mrf.mxu0
    %v274 = vadd.f32 %v190, %v273
    %v275 = vpop.f32.mrf.mxu0
    %v276 = vpop.f32.mrf.mxu0
    %v277 = vadd.f32 %v190, %v276
    %v278 = vpop.f32.mrf.mxu0
    %279 = vmatprep.mubr.bf16.mxu0 0
    %280 = vmatmul.mubr.bf16.gmra.mxu0 %v169
    %v281 = vpop.f32.mrf.mxu0
    %v282 = vadd.f32 %v190, %v281
    %v283 = vpop.f32.mrf.mxu0
    %v284 = vpop.f32.mrf.mxu0
    %v285 = vadd.f32 %v190, %v284
    %v286 = vpop.f32.mrf.mxu0
    %287 = vdwg.mxu0
    %v288 = vmax.f32 %v274, 0.0
    %v289 = vmax.f32 %v277, 0.0
    %v290 = vmax.f32 %v282, 0.0
    %v291 = vmax.f32 %v285, 0.0
    %v292 = vpack.c.bf16 %v288, %v288
    %v293 = vpack.c.bf16 %v290, %v290
    %v294 = vpack.c.bf16 %v289, %v289
    %v295 = vpack.c.bf16 %v291, %v291
    %296 = vmatprep.subr.bf16.mxu0 0
    %297 = vmatpush1.bf16.xpose.msra.mxu0 0
    %298 = vmatprep.subr.bf16.mxu0 0
    %299 = vmatpush1.bf16.xpose.msra.mxu0 0
    %300 = vmatprep.subr.bf16.mxu0 0
    %301 = vmatpush1.bf16.xpose.msra.mxu0 0
    %302 = vmatprep.subr.bf16.mxu0 0
    %303 = vmatpush1.bf16.xpose.msra.mxu0 0
    %304 = vmatprep.subr.bf16.mxu0 0
    %305 = vmatpush1.bf16.xpose.msra.mxu0 0
    %306 = vmatprep.subr.bf16.mxu0 0
    %307 = vmatpush1.bf16.xpose.msra.mxu0 0
    %308 = vmatprep.subr.bf16.mxu0 0
    %309 = vmatpush1.bf16.xpose.msra.mxu0 0
    %310 = vmatprep.subr.bf16.mxu0 0
    %311 = vmatpush1.bf16.xpose.msra.mxu0 %v294
    %312 = vmatprep.subr.bf16.mxu0 0
    %313 = vmatpush2.bf16.xpose.msra.mxu0 0
    %314 = vmatprep.subr.bf16.mxu0 0
    %315 = vmatpush2.bf16.xpose.msra.mxu0 0
    %316 = vmatprep.subr.bf16.mxu0 0
    %317 = vmatpush2.bf16.xpose.msra.mxu0 0
    %318 = vmatprep.subr.bf16.mxu0 0
    %319 = vmatpush2.bf16.xpose.msra.mxu0 0
    %320 = vmatprep.subr.bf16.mxu0 0
    %321 = vmatpush2.bf16.xpose.msra.mxu0 0
    %322 = vmatprep.subr.bf16.mxu0 0
    %323 = vmatpush2.bf16.xpose.msra.mxu0 0
    %324 = vmatprep.subr.bf16.mxu0 0
    %325 = vmatpush2.bf16.xpose.msra.mxu0 0
    %326 = vmatprep.subr.bf16.mxu0 0
    %327 = vmatpush2.bf16.xpose.msra.mxu0 0
    %328 = vmatprep.mubr.bf16.mxu0 0
    %329 = vmatmul.mubr.bf16.gmra.mxu0 %v292
    %v330 = vpop.f32.mrf.mxu0
    %v331 = vadd.f32 0.0, %v330
    %v332 = vpop.f32.mrf.mxu0
    %v333 = vpop.f32.mrf.mxu0
    %v334 = vpop.f32.mrf.mxu0
    %335 = vdwg.mxu0
    %336 = vmatprep.subr.bf16.mxu0 0
    %337 = vmatpush1.bf16.xpose.msra.mxu0 0
    %338 = vmatprep.subr.bf16.mxu0 0
    %339 = vmatpush1.bf16.xpose.msra.mxu0 0
    %340 = vmatprep.subr.bf16.mxu0 0
    %341 = vmatpush1.bf16.xpose.msra.mxu0 0
    %342 = vmatprep.subr.bf16.mxu0 0
    %343 = vmatpush1.bf16.xpose.msra.mxu0 0
    %344 = vmatprep.subr.bf16.mxu0 0
    %345 = vmatpush1.bf16.xpose.msra.mxu0 0
    %346 = vmatprep.subr.bf16.mxu0 0
    %347 = vmatpush1.bf16.xpose.msra.mxu0 0
    %348 = vmatprep.subr.bf16.mxu0 0
    %349 = vmatpush1.bf16.xpose.msra.mxu0 0
    %350 = vmatprep.subr.bf16.mxu0 0
    %351 = vmatpush1.bf16.xpose.msra.mxu0 %v295
    %352 = vmatprep.subr.bf16.mxu0 0
    %353 = vmatpush2.bf16.xpose.msra.mxu0 0
    %354 = vmatprep.subr.bf16.mxu0 0
    %355 = vmatpush2.bf16.xpose.msra.mxu0 0
    %356 = vmatprep.subr.bf16.mxu0 0
    %357 = vmatpush2.bf16.xpose.msra.mxu0 0
    %358 = vmatprep.subr.bf16.mxu0 0
    %359 = vmatpush2.bf16.xpose.msra.mxu0 0
    %360 = vmatprep.subr.bf16.mxu0 0
    %361 = vmatpush2.bf16.xpose.msra.mxu0 0
    %362 = vmatprep.subr.bf16.mxu0 0
    %363 = vmatpush2.bf16.xpose.msra.mxu0 0
    %364 = vmatprep.subr.bf16.mxu0 0
    %365 = vmatpush2.bf16.xpose.msra.mxu0 0
    %366 = vmatprep.subr.bf16.mxu0 0
    %367 = vmatpush2.bf16.xpose.msra.mxu0 0
    %368 = vmatprep.mubr.bf16.mxu0 0
    %369 = vmatmul.mubr.bf16.gmra.mxu0 %v293
    %v370 = vpop.f32.mrf.mxu0
    %v371 = vadd.f32 0.0, %v370
    %v372 = vpop.f32.mrf.mxu0
    %v373 = vpop.f32.mrf.mxu0
    %v374 = vpop.f32.mrf.mxu0
    %375 = vdwg.mxu0
    %376 = vmatprep.subr.bf16.mxu0 0
    %377 = vmatpush1.bf16.xpose.msra.mxu0 0
    %378 = vmatprep.subr.bf16.mxu0 0
    %379 = vmatpush1.bf16.xpose.msra.mxu0 0
    %380 = vmatprep.subr.bf16.mxu0 0
    %381 = vmatpush1.bf16.xpose.msra.mxu0 0
    %382 = vmatprep.subr.bf16.mxu0 0
    %383 = vmatpush1.bf16.xpose.msra.mxu0 0
    %384 = vmatprep.subr.bf16.mxu0 0
    %385 = vmatpush1.bf16.xpose.msra.mxu0 0
    %386 = vmatprep.subr.bf16.mxu0 0
    %387 = vmatpush1.bf16.xpose.msra.mxu0 0
    %388 = vmatprep.subr.bf16.mxu0 0
    %389 = vmatpush1.bf16.xpose.msra.mxu0 0
    %390 = vmatprep.subr.bf16.mxu0 0
    %391 = vmatpush1.bf16.xpose.msra.mxu0 %v292
    %392 = vmatprep.subr.bf16.mxu0 0
    %393 = vmatpush2.bf16.xpose.msra.mxu0 0
    %394 = vmatprep.subr.bf16.mxu0 0
    %395 = vmatpush2.bf16.xpose.msra.mxu0 0
    %396 = vmatprep.subr.bf16.mxu0 0
    %397 = vmatpush2.bf16.xpose.msra.mxu0 0
    %398 = vmatprep.subr.bf16.mxu0 0
    %399 = vmatpush2.bf16.xpose.msra.mxu0 0
    %400 = vmatprep.subr.bf16.mxu0 0
    %401 = vmatpush2.bf16.xpose.msra.mxu0 0
    %402 = vmatprep.subr.bf16.mxu0 0
    %403 = vmatpush2.bf16.xpose.msra.mxu0 0
    %404 = vmatprep.subr.bf16.mxu0 0
    %405 = vmatpush2.bf16.xpose.msra.mxu0 0
    %406 = vmatprep.subr.bf16.mxu0 0
    %407 = vmatpush2.bf16.xpose.msra.mxu0 0
    %408 = vmatprep.mubr.bf16.mxu0 0
    %409 = vmatmul.mubr.bf16.gmra.mxu0 %v294
    %v410 = vpop.f32.mrf.mxu0
    %v411 = vadd.f32 0.0, %v410
    %v412 = vpop.f32.mrf.mxu0
    %v413 = vpop.f32.mrf.mxu0
    %v414 = vpop.f32.mrf.mxu0
    %415 = vdwg.mxu0
    %416 = vmatprep.subr.bf16.mxu0 0
    %417 = vmatpush1.bf16.xpose.msra.mxu0 0
    %418 = vmatprep.subr.bf16.mxu0 0
    %419 = vmatpush1.bf16.xpose.msra.mxu0 0
    %420 = vmatprep.subr.bf16.mxu0 0
    %421 = vmatpush1.bf16.xpose.msra.mxu0 0
    %422 = vmatprep.subr.bf16.mxu0 0
    %423 = vmatpush1.bf16.xpose.msra.mxu0 0
    %424 = vmatprep.subr.bf16.mxu0 0
    %425 = vmatpush1.bf16.xpose.msra.mxu0 0
    %426 = vmatprep.subr.bf16.mxu0 0
    %427 = vmatpush1.bf16.xpose.msra.mxu0 0
    %428 = vmatprep.subr.bf16.mxu0 0
    %429 = vmatpush1.bf16.xpose.msra.mxu0 0
    %430 = vmatprep.subr.bf16.mxu0 0
    %431 = vmatpush1.bf16.xpose.msra.mxu0 %v293
    %432 = vmatprep.subr.bf16.mxu0 0
    %433 = vmatpush2.bf16.xpose.msra.mxu0 0
    %434 = vmatprep.subr.bf16.mxu0 0
    %435 = vmatpush2.bf16.xpose.msra.mxu0 0
    %436 = vmatprep.subr.bf16.mxu0 0
    %437 = vmatpush2.bf16.xpose.msra.mxu0 0
    %438 = vmatprep.subr.bf16.mxu0 0
    %439 = vmatpush2.bf16.xpose.msra.mxu0 0
    %440 = vmatprep.subr.bf16.mxu0 0
    %441 = vmatpush2.bf16.xpose.msra.mxu0 0
    %442 = vmatprep.subr.bf16.mxu0 0
    %443 = vmatpush2.bf16.xpose.msra.mxu0 0
    %444 = vmatprep.subr.bf16.mxu0 0
    %445 = vmatpush2.bf16.xpose.msra.mxu0 0
    %446 = vmatprep.subr.bf16.mxu0 0
    %447 = vmatpush2.bf16.xpose.msra.mxu0 0
    %448 = vmatprep.mubr.bf16.mxu0 0
    %449 = vmatmul.mubr.bf16.gmra.mxu0 %v295
    %v450 = vpop.f32.mrf.mxu0
    %v451 = vadd.f32 0.0, %v450
    %v452 = vpop.f32.mrf.mxu0
    %v453 = vpop.f32.mrf.mxu0
    %v454 = vpop.f32.mrf.mxu0
    %455 = vdwg.mxu0
    %vm456 = vcmask 64512
    %v457 = vsel %vm456, %v331, -inf
    %458 = vmax.xlane.f32.xlu0 %v457
    %v459 = vpop.xlane.xlu0 %458
    %v460 = vsel %vm456, %v371, -inf
    %461 = vmax.xlane.f32.xlu0 %v460
    %v462 = vpop.xlane.xlu0 %461
    %v463 = vsub.f32 %v331, %v459
    %v464 = vsub.f32 %v371, %v462
    %v465 = vmul.f32 %v463, 1.442695
    %v466 = vpow.pop %v465
    %v467 = vmul.f32 %v464, 1.442695
    %v468 = vpow.pop %v467
    %v469 = vsel %vm456, %v466, 0.0
    %470 = vadd.xlane.f32.xlu0 %v469
    %v471 = vpop.xlane.xlu0 %470
    %v472 = vsel %vm456, %v468, 0.0
    %473 = vadd.xlane.f32.xlu0 %v472
    %v474 = vpop.xlane.xlu0 %473
    %v475 = vrcp.pop %v471
    %v476 = vrcp.pop %v474
    %v477 = vmul.f32 %v466, %v475
    %v478 = vmul.f32 %v468, %v476
    %v479 = vsel %vm456, %v411, -inf
    %480 = vmax.xlane.f32.xlu0 %v479
    %v481 = vpop.xlane.xlu0 %480
    %v482 = vsel %vm456, %v451, -inf
    %483 = vmax.xlane.f32.xlu0 %v482
    %v484 = vpop.xlane.xlu0 %483
    %v485 = vsub.f32 %v411, %v481
    %v486 = vsub.f32 %v451, %v484
    %v487 = vmul.f32 %v485, 1.442695
    %v488 = vpow.pop %v487
    %v489 = vmul.f32 %v486, 1.442695
    %v490 = vpow.pop %v489
    %v491 = vsel %vm456, %v488, 0.0
    %492 = vadd.xlane.f32.xlu0 %v491
    %v493 = vpop.xlane.xlu0 %492
    %v494 = vsel %vm456, %v490, 0.0
    %495 = vadd.xlane.f32.xlu0 %v494
    %v496 = vpop.xlane.xlu0 %495
    %v497 = vrcp.pop %v493
    %v498 = vrcp.pop %v496
    %v499 = vmul.f32 %v488, %v497
    %v500 = vmul.f32 %v490, %v498
    %v501 = vpack.c.bf16 %v477, %v477
    %v502 = vpack.c.bf16 %v478, %v478
    %v504 = vsel %vm456, %v501, 0
    %vm506 = vcmask 1043456
    %v508 = vsel %vm506, %v32, 0
    %510 = vmatprep.subr.bf16.mxu0 0
    %511 = vmatpush1.bf16.msra.mxu0 0
    %512 = vmatprep.subr.bf16.mxu0 0
    %513 = vmatpush1.bf16.msra.mxu0 0
    %514 = vmatprep.subr.bf16.mxu0 0
    %515 = vmatpush1.bf16.msra.mxu0 0
    %516 = vmatprep.subr.bf16.mxu0 0
    %517 = vmatpush1.bf16.msra.mxu0 0
    %518 = vmatprep.subr.bf16.mxu0 0
    %519 = vmatpush1.bf16.msra.mxu0 0
    %520 = vmatprep.subr.bf16.mxu0 0
    %521 = vmatpush1.bf16.msra.mxu0 0
    %522 = vmatprep.subr.bf16.mxu0 0
    %523 = vmatpush1.bf16.msra.mxu0 0
    %524 = vmatprep.subr.bf16.mxu0 0
    %525 = vmatpush1.bf16.msra.mxu0 %v508
    %526 = vmatprep.subr.bf16.mxu0 0
    %527 = vmatpush2.bf16.msra.mxu0 0
    %528 = vmatprep.subr.bf16.mxu0 0
    %529 = vmatpush2.bf16.msra.mxu0 0
    %530 = vmatprep.subr.bf16.mxu0 0
    %531 = vmatpush2.bf16.msra.mxu0 0
    %532 = vmatprep.subr.bf16.mxu0 0
    %533 = vmatpush2.bf16.msra.mxu0 0
    %534 = vmatprep.subr.bf16.mxu0 0
    %535 = vmatpush2.bf16.msra.mxu0 0
    %536 = vmatprep.subr.bf16.mxu0 0
    %537 = vmatpush2.bf16.msra.mxu0 0
    %538 = vmatprep.subr.bf16.mxu0 0
    %539 = vmatpush2.bf16.msra.mxu0 0
    %540 = vmatprep.subr.bf16.mxu0 0
    %541 = vmatpush2.bf16.msra.mxu0 0
    %542 = vmatprep.mubr.bf16.mxu0 0
    %543 = vmatmul.mubr.bf16.gmra.mxu0 %v504
    %v544 = vpop.f32.mrf.mxu0
    %v545 = vadd.f32 0.0, %v544
    %v546 = vpop.f32.mrf.mxu0
    %v547 = vpop.f32.mrf.mxu0
    %v548 = vpop.f32.mrf.mxu0
    %549 = vdwg.mxu0
    %v551 = vsel %vm456, %v502, 0
    %v554 = vsel %vm506, %v34, 0
    %556 = vmatprep.subr.bf16.mxu0 0
    %557 = vmatpush1.bf16.msra.mxu0 0
    %558 = vmatprep.subr.bf16.mxu0 0
    %559 = vmatpush1.bf16.msra.mxu0 0
    %560 = vmatprep.subr.bf16.mxu0 0
    %561 = vmatpush1.bf16.msra.mxu0 0
    %562 = vmatprep.subr.bf16.mxu0 0
    %563 = vmatpush1.bf16.msra.mxu0 0
    %564 = vmatprep.subr.bf16.mxu0 0
    %565 = vmatpush1.bf16.msra.mxu0 0
    %566 = vmatprep.subr.bf16.mxu0 0
    %567 = vmatpush1.bf16.msra.mxu0 0
    %568 = vmatprep.subr.bf16.mxu0 0
    %569 = vmatpush1.bf16.msra.mxu0 0
    %570 = vmatprep.subr.bf16.mxu0 0
    %571 = vmatpush1.bf16.msra.mxu0 %v554
    %572 = vmatprep.subr.bf16.mxu0 0
    %573 = vmatpush2.bf16.msra.mxu0 0
    %574 = vmatprep.subr.bf16.mxu0 0
    %575 = vmatpush2.bf16.msra.mxu0 0
    %576 = vmatprep.subr.bf16.mxu0 0
    %577 = vmatpush2.bf16.msra.mxu0 0
    %578 = vmatprep.subr.bf16.mxu0 0
    %579 = vmatpush2.bf16.msra.mxu0 0
    %580 = vmatprep.subr.bf16.mxu0 0
    %581 = vmatpush2.bf16.msra.mxu0 0
    %582 = vmatprep.subr.bf16.mxu0 0
    %583 = vmatpush2.bf16.msra.mxu0 0
    %584 = vmatprep.subr.bf16.mxu0 0
    %585 = vmatpush2.bf16.msra.mxu0 0
    %586 = vmatprep.subr.bf16.mxu0 0
    %587 = vmatpush2.bf16.msra.mxu0 0
    %588 = vmatprep.mubr.bf16.mxu0 0
    %589 = vmatmul.mubr.bf16.gmra.mxu0 %v551
    %v590 = vpop.f32.mrf.mxu0
    %v591 = vadd.f32 0.0, %v590
    %v592 = vpop.f32.mrf.mxu0
    %v593 = vpop.f32.mrf.mxu0
    %v594 = vpop.f32.mrf.mxu0
    %595 = vdwg.mxu0
    %v596 = vpack.c.bf16 %v499, %v499
    %v597 = vpack.c.bf16 %v500, %v500
    %v599 = vsel %vm456, %v596, 0
    %v602 = vsel %vm506, %v31, 0
    %604 = vmatprep.subr.bf16.mxu0 0
    %605 = vmatpush1.bf16.msra.mxu0 0
    %606 = vmatprep.subr.bf16.mxu0 0
    %607 = vmatpush1.bf16.msra.mxu0 0
    %608 = vmatprep.subr.bf16.mxu0 0
    %609 = vmatpush1.bf16.msra.mxu0 0
    %610 = vmatprep.subr.bf16.mxu0 0
    %611 = vmatpush1.bf16.msra.mxu0 0
    %612 = vmatprep.subr.bf16.mxu0 0
    %613 = vmatpush1.bf16.msra.mxu0 0
    %614 = vmatprep.subr.bf16.mxu0 0
    %615 = vmatpush1.bf16.msra.mxu0 0
    %616 = vmatprep.subr.bf16.mxu0 0
    %617 = vmatpush1.bf16.msra.mxu0 0
    %618 = vmatprep.subr.bf16.mxu0 0
    %619 = vmatpush1.bf16.msra.mxu0 %v602
    %620 = vmatprep.subr.bf16.mxu0 0
    %621 = vmatpush2.bf16.msra.mxu0 0
    %622 = vmatprep.subr.bf16.mxu0 0
    %623 = vmatpush2.bf16.msra.mxu0 0
    %624 = vmatprep.subr.bf16.mxu0 0
    %625 = vmatpush2.bf16.msra.mxu0 0
    %626 = vmatprep.subr.bf16.mxu0 0
    %627 = vmatpush2.bf16.msra.mxu0 0
    %628 = vmatprep.subr.bf16.mxu0 0
    %629 = vmatpush2.bf16.msra.mxu0 0
    %630 = vmatprep.subr.bf16.mxu0 0
    %631 = vmatpush2.bf16.msra.mxu0 0
    %632 = vmatprep.subr.bf16.mxu0 0
    %633 = vmatpush2.bf16.msra.mxu0 0
    %634 = vmatprep.subr.bf16.mxu0 0
    %635 = vmatpush2.bf16.msra.mxu0 0
    %636 = vmatprep.mubr.bf16.mxu0 0
    %637 = vmatmul.mubr.bf16.gmra.mxu0 %v599
    %v638 = vpop.f32.mrf.mxu0
    %v639 = vadd.f32 0.0, %v638
    %v640 = vpop.f32.mrf.mxu0
    %v641 = vpop.f32.mrf.mxu0
    %v642 = vpop.f32.mrf.mxu0
    %643 = vdwg.mxu0
    %v645 = vsel %vm456, %v597, 0
    %v648 = vsel %vm506, %v33, 0
    %650 = vmatprep.subr.bf16.mxu0 0
    %651 = vmatpush1.bf16.msra.mxu0 0
    %652 = vmatprep.subr.bf16.mxu0 0
    %653 = vmatpush1.bf16.msra.mxu0 0
    %654 = vmatprep.subr.bf16.mxu0 0
    %655 = vmatpush1.bf16.msra.mxu0 0
    %656 = vmatprep.subr.bf16.mxu0 0
    %657 = vmatpush1.bf16.msra.mxu0 0
    %658 = vmatprep.subr.bf16.mxu0 0
    %659 = vmatpush1.bf16.msra.mxu0 0
    %660 = vmatprep.subr.bf16.mxu0 0
    %661 = vmatpush1.bf16.msra.mxu0 0
    %662 = vmatprep.subr.bf16.mxu0 0
    %663 = vmatpush1.bf16.msra.mxu0 0
    %664 = vmatprep.subr.bf16.mxu0 0
    %665 = vmatpush1.bf16.msra.mxu0 %v648
    %666 = vmatprep.subr.bf16.mxu0 0
    %667 = vmatpush2.bf16.msra.mxu0 0
    %668 = vmatprep.subr.bf16.mxu0 0
    %669 = vmatpush2.bf16.msra.mxu0 0
    %670 = vmatprep.subr.bf16.mxu0 0
    %671 = vmatpush2.bf16.msra.mxu0 0
    %672 = vmatprep.subr.bf16.mxu0 0
    %673 = vmatpush2.bf16.msra.mxu0 0
    %674 = vmatprep.subr.bf16.mxu0 0
    %675 = vmatpush2.bf16.msra.mxu0 0
    %676 = vmatprep.subr.bf16.mxu0 0
    %677 = vmatpush2.bf16.msra.mxu0 0
    %678 = vmatprep.subr.bf16.mxu0 0
    %679 = vmatpush2.bf16.msra.mxu0 0
    %680 = vmatprep.subr.bf16.mxu0 0
    %681 = vmatpush2.bf16.msra.mxu0 0
    %682 = vmatprep.mubr.bf16.mxu0 0
    %683 = vmatmul.mubr.bf16.gmra.mxu0 %v645
    %v684 = vpop.f32.mrf.mxu0
    %v685 = vadd.f32 0.0, %v684
    %v686 = vpop.f32.mrf.mxu0
    %v687 = vpop.f32.mrf.mxu0
    %v688 = vpop.f32.mrf.mxu0
    %689 = vdwg.mxu0
    %690 = vst [vmem:[#allocation2] sm:$0xff] %v545
    %691 = vst [vmem:[#allocation2 + $0x10] sm:$0xff] %v591
    %692 = vst [vmem:[#allocation2 + $0x8] sm:$0xff] %v639
    %693 = vst [vmem:[#allocation2 + $0x18] sm:$0xff] %v685
    %v694 = vld [vmem:[#allocation2] sm:$0xff]
    %v695 = vld [vmem:[#allocation2 + $0x8] sm:$0xff]
    %v696 = vld [vmem:[#allocation2 + $0x10] sm:$0xff]
    %v697 = vld [vmem:[#allocation2 + $0x18] sm:$0xff]
    %v698 = vpack.c.bf16 %v695, %v694
    %v699 = vpack.c.bf16 %v697, %v696
    %s700 = scalar_lea.vmem [#allocation3], 128
    %v701 = vld [vmem:[%s700] sm:$0xf]
    %v702 = vld [vmem:[%s700 + $0x4] sm:$0xf]
    %v703 = vld [vmem:[%s700 + $0x8] sm:$0xf]
    %v704 = vld [vmem:[%s700 + $0xc] sm:$0xf]
    %v705 = vld [vmem:[%s700 + $0x10] sm:$0xf]
    %v706 = vld [vmem:[%s700 + $0x14] sm:$0xf]
    %v707 = vld [vmem:[%s700 + $0x18] sm:$0xf]
    %v708 = vld [vmem:[%s700 + $0x1c] sm:$0xf]
    %v709 = vld [vmem:[%s700 + $0x20] sm:$0xf]
    %v710 = vld [vmem:[%s700 + $0x24] sm:$0xf]
    %v711 = vld [vmem:[%s700 + $0x28] sm:$0xf]
    %v712 = vld [vmem:[%s700 + $0x2c] sm:$0xf]
    %v713 = vld [vmem:[%s700 + $0x30] sm:$0xf]
    %v714 = vld [vmem:[%s700 + $0x34] sm:$0xf]
    %v715 = vld [vmem:[%s700 + $0x38] sm:$0xf]
    %v716 = vld [vmem:[%s700 + $0x3c] sm:$0xf]
    %s717 = scalar_lea.vmem [#allocation3], 192
    %v718 = vld [vmem:[%s717] sm:$0xf]
    %v719 = vld [vmem:[%s717 + $0x4] sm:$0xf]
    %v720 = vld [vmem:[%s717 + $0x8] sm:$0xf]
    %v721 = vld [vmem:[%s717 + $0xc] sm:$0xf]
    %v722 = vld [vmem:[%s717 + $0x10] sm:$0xf]
    %v723 = vld [vmem:[%s717 + $0x14] sm:$0xf]
    %v724 = vld [vmem:[%s717 + $0x18] sm:$0xf]
    %v725 = vld [vmem:[%s717 + $0x1c] sm:$0xf]
    %v726 = vld [vmem:[%s717 + $0x20] sm:$0xf]
    %v727 = vld [vmem:[%s717 + $0x24] sm:$0xf]
    %v728 = vld [vmem:[%s717 + $0x28] sm:$0xf]
    %v729 = vld [vmem:[%s717 + $0x2c] sm:$0xf]
    %v730 = vld [vmem:[%s717 + $0x30] sm:$0xf]
    %v731 = vld [vmem:[%s717 + $0x34] sm:$0xf]
    %v732 = vld [vmem:[%s717 + $0x38] sm:$0xf]
    %v733 = vld [vmem:[%s717 + $0x3c] sm:$0xf]
    %v750 = vunpack.c.l.b16 %v718
    %v751 = vunpack.c.l.b16 %v719
    %v752 = vunpack.c.l.b16 %v720
    %v753 = vunpack.c.l.b16 %v721
    %v754 = vunpack.c.l.b16 %v722
    %v755 = vunpack.c.l.b16 %v723
    %v756 = vunpack.c.l.b16 %v724
    %v757 = vunpack.c.l.b16 %v725
    %v758 = vunpack.c.l.b16 %v726
    %v759 = vunpack.c.l.b16 %v727
    %v760 = vunpack.c.l.b16 %v728
    %v761 = vunpack.c.l.b16 %v729
    %v762 = vunpack.c.l.b16 %v730
    %v763 = vunpack.c.l.b16 %v731
    %v764 = vunpack.c.l.b16 %v732
    %v765 = vunpack.c.l.b16 %v733
    %v766 = vpack.c.b16 %v751, %v750
    %v767 = vpack.c.b16 %v753, %v752
    %v768 = vpack.c.b16 %v755, %v754
    %v769 = vpack.c.b16 %v757, %v756
    %v770 = vpack.c.b16 %v759, %v758
    %v771 = vpack.c.b16 %v761, %v760
    %v772 = vpack.c.b16 %v763, %v762
    %v773 = vpack.c.b16 %v765, %v764
    %782 = vmatprep.subr.bf16.mxu0 0
    %783 = vmatpush1.bf16.msra.mxu0 %v773
    %784 = vmatprep.subr.bf16.mxu0 0
    %785 = vmatpush1.bf16.msra.mxu0 %v772
    %786 = vmatprep.subr.bf16.mxu0 0
    %787 = vmatpush1.bf16.msra.mxu0 %v771
    %788 = vmatprep.subr.bf16.mxu0 0
    %789 = vmatpush1.bf16.msra.mxu0 %v770
    %790 = vmatprep.subr.bf16.mxu0 0
    %791 = vmatpush1.bf16.msra.mxu0 %v769
    %792 = vmatprep.subr.bf16.mxu0 0
    %793 = vmatpush1.bf16.msra.mxu0 %v768
    %794 = vmatprep.subr.bf16.mxu0 0
    %795 = vmatpush1.bf16.msra.mxu0 %v767
    %796 = vmatprep.subr.bf16.mxu0 0
    %797 = vmatpush1.bf16.msra.mxu0 %v766
    %798 = vmatprep.subr.bf16.mxu0 0
    %799 = vmatpush2.bf16.msra.mxu0 0
    %800 = vmatprep.subr.bf16.mxu0 0
    %801 = vmatpush2.bf16.msra.mxu0 0
    %802 = vmatprep.subr.bf16.mxu0 0
    %803 = vmatpush2.bf16.msra.mxu0 0
    %804 = vmatprep.subr.bf16.mxu0 0
    %805 = vmatpush2.bf16.msra.mxu0 0
    %806 = vmatprep.subr.bf16.mxu0 0
    %807 = vmatpush2.bf16.msra.mxu0 0
    %808 = vmatprep.subr.bf16.mxu0 0
    %809 = vmatpush2.bf16.msra.mxu0 0
    %810 = vmatprep.subr.bf16.mxu0 0
    %811 = vmatpush2.bf16.msra.mxu0 0
    %812 = vmatprep.subr.bf16.mxu0 0
    %813 = vmatpush2.bf16.msra.mxu0 0
    %814 = vmatprep.mubr.bf16.mxu0 0
    %815 = vmatmul.mubr.bf16.gmra.mxu0 %v698
    %v816 = vpop.f32.mrf.mxu0
    %v817 = vadd.f32 0.0, %v816
    %v818 = vpop.f32.mrf.mxu0
    %v819 = vpop.f32.mrf.mxu0
    %v820 = vadd.f32 0.0, %v819
    %v821 = vpop.f32.mrf.mxu0
    %822 = vmatprep.mubr.bf16.mxu0 0
    %823 = vmatmul.mubr.bf16.gmra.mxu0 %v699
    %v824 = vpop.f32.mrf.mxu0
    %v825 = vadd.f32 0.0, %v824
    %v826 = vpop.f32.mrf.mxu0
    %v827 = vpop.f32.mrf.mxu0
    %v828 = vadd.f32 0.0, %v827
    %v829 = vpop.f32.mrf.mxu0
    %830 = vdwg.mxu0
    %v847 = vunpack.c.l.b16 %v701
    %v848 = vunpack.c.l.b16 %v702
    %v849 = vunpack.c.l.b16 %v703
    %v850 = vunpack.c.l.b16 %v704
    %v851 = vunpack.c.l.b16 %v705
    %v852 = vunpack.c.l.b16 %v706
    %v853 = vunpack.c.l.b16 %v707
    %v854 = vunpack.c.l.b16 %v708
    %v855 = vunpack.c.l.b16 %v709
    %v856 = vunpack.c.l.b16 %v710
    %v857 = vunpack.c.l.b16 %v711
    %v858 = vunpack.c.l.b16 %v712
    %v859 = vunpack.c.l.b16 %v713
    %v860 = vunpack.c.l.b16 %v714
    %v861 = vunpack.c.l.b16 %v715
    %v862 = vunpack.c.l.b16 %v716
    %v863 = vpack.c.b16 %v848, %v847
    %v864 = vpack.c.b16 %v850, %v849
    %v865 = vpack.c.b16 %v852, %v851
    %v866 = vpack.c.b16 %v854, %v853
    %v867 = vpack.c.b16 %v856, %v855
    %v868 = vpack.c.b16 %v858, %v857
    %v869 = vpack.c.b16 %v860, %v859
    %v870 = vpack.c.b16 %v862, %v861
    %879 = vmatprep.subr.bf16.mxu0 0
    %880 = vmatpush1.bf16.msra.mxu0 %v870
    %881 = vmatprep.subr.bf16.mxu0 0
    %882 = vmatpush1.bf16.msra.mxu0 %v869
    %883 = vmatprep.subr.bf16.mxu0 0
    %884 = vmatpush1.bf16.msra.mxu0 %v868
    %885 = vmatprep.subr.bf16.mxu0 0
    %886 = vmatpush1.bf16.msra.mxu0 %v867
    %887 = vmatprep.subr.bf16.mxu0 0
    %888 = vmatpush1.bf16.msra.mxu0 %v866
    %889 = vmatprep.subr.bf16.mxu0 0
    %890 = vmatpush1.bf16.msra.mxu0 %v865
    %891 = vmatprep.subr.bf16.mxu0 0
    %892 = vmatpush1.bf16.msra.mxu0 %v864
    %893 = vmatprep.subr.bf16.mxu0 0
    %894 = vmatpush1.bf16.msra.mxu0 %v863
    %895 = vmatprep.subr.bf16.mxu0 0
    %896 = vmatpush2.bf16.msra.mxu0 0
    %897 = vmatprep.subr.bf16.mxu0 0
    %898 = vmatpush2.bf16.msra.mxu0 0
    %899 = vmatprep.subr.bf16.mxu0 0
    %900 = vmatpush2.bf16.msra.mxu0 0
    %901 = vmatprep.subr.bf16.mxu0 0
    %902 = vmatpush2.bf16.msra.mxu0 0
    %903 = vmatprep.subr.bf16.mxu0 0
    %904 = vmatpush2.bf16.msra.mxu0 0
    %905 = vmatprep.subr.bf16.mxu0 0
    %906 = vmatpush2.bf16.msra.mxu0 0
    %907 = vmatprep.subr.bf16.mxu0 0
    %908 = vmatpush2.bf16.msra.mxu0 0
    %909 = vmatprep.subr.bf16.mxu0 0
    %910 = vmatpush2.bf16.msra.mxu0 0
    %911 = vmatprep.mubr.bf16.mxu0 0
    %912 = vmatmul.mubr.bf16.gmra.mxu0 %v63
    %v913 = vpop.f32.mrf.mxu0
    %v914 = vadd.f32 %v817, %v913
    %v915 = vpop.f32.mrf.mxu0
    %v916 = vpop.f32.mrf.mxu0
    %v917 = vadd.f32 %v820, %v916
    %v918 = vpop.f32.mrf.mxu0
    %919 = vmatprep.mubr.bf16.mxu0 0
    %920 = vmatmul.mubr.bf16.gmra.mxu0 %v64
    %v921 = vpop.f32.mrf.mxu0
    %v922 = vadd.f32 %v825, %v921
    %v923 = vpop.f32.mrf.mxu0
    %v924 = vpop.f32.mrf.mxu0
    %v925 = vadd.f32 %v828, %v924
    %v926 = vpop.f32.mrf.mxu0
    %927 = vdwg.mxu0
    %v928 = vlaneseq
    %v929 = vshrl.u32 %v928, 7
    %v930 = vsub.s32 2, %v929
    %v931 = vrot.slane %v30, %v930
    %v932 = vadd.f32 %v914, %v931
    %v933 = vadd.f32 %v917, %v931
    %v934 = vadd.f32 %v922, %v931
    %v935 = vadd.f32 %v925, %v931
    %v936 = vmax.f32 %v932, 0.0
    %v937 = vmax.f32 %v933, 0.0
    %v938 = vmax.f32 %v934, 0.0
    %v939 = vmax.f32 %v935, 0.0
    %v940 = vpack.c.bf16 %v937, %v936
    %v941 = vpack.c.bf16 %v939, %v938
    %s942 = scalar_lea.vmem [#allocation3], 256
    %v943 = vld [vmem:[%s942] sm:$0xf]
    %v944 = vld [vmem:[%s942 + $0x4] sm:$0xf]
    %v945 = vld [vmem:[%s942 + $0x8] sm:$0xf]
    %v946 = vld [vmem:[%s942 + $0xc] sm:$0xf]
    %v947 = vld [vmem:[%s942 + $0x10] sm:$0xf]
    %v948 = vld [vmem:[%s942 + $0x14] sm:$0xf]
    %v949 = vld [vmem:[%s942 + $0x18] sm:$0xf]
    %v950 = vld [vmem:[%s942 + $0x1c] sm:$0xf]
    %v951 = vld [vmem:[%s942 + $0x20] sm:$0xf]
    %v952 = vld [vmem:[%s942 + $0x24] sm:$0xf]
    %v953 = vld [vmem:[%s942 + $0x28] sm:$0xf]
    %v954 = vld [vmem:[%s942 + $0x2c] sm:$0xf]
    %v955 = vld [vmem:[%s942 + $0x30] sm:$0xf]
    %v956 = vld [vmem:[%s942 + $0x34] sm:$0xf]
    %v957 = vld [vmem:[%s942 + $0x38] sm:$0xf]
    %v958 = vld [vmem:[%s942 + $0x3c] sm:$0xf]
    %v959 = vlaneseq
    %v960 = vshrl.u32 %v959, 7
    %v961 = vsub.s32 3, %v960
    %v962 = vrot.slane %v30, %v961
    %v979 = vunpack.c.l.b16 %v943
    %v980 = vunpack.c.l.b16 %v944
    %v981 = vunpack.c.l.b16 %v945
    %v982 = vunpack.c.l.b16 %v946
    %v983 = vunpack.c.l.b16 %v947
    %v984 = vunpack.c.l.b16 %v948
    %v985 = vunpack.c.l.b16 %v949
    %v986 = vunpack.c.l.b16 %v950
    %v987 = vunpack.c.l.b16 %v951
    %v988 = vunpack.c.l.b16 %v952
    %v989 = vunpack.c.l.b16 %v953
    %v990 = vunpack.c.l.b16 %v954
    %v991 = vunpack.c.l.b16 %v955
    %v992 = vunpack.c.l.b16 %v956
    %v993 = vunpack.c.l.b16 %v957
    %v994 = vunpack.c.l.b16 %v958
    %v995 = vpack.c.b16 %v980, %v979
    %v996 = vpack.c.b16 %v982, %v981
    %v997 = vpack.c.b16 %v984, %v983
    %v998 = vpack.c.b16 %v986, %v985
    %v999 = vpack.c.b16 %v988, %v987
    %v1000 = vpack.c.b16 %v990, %v989
    %v1001 = vpack.c.b16 %v992, %v991
    %v1002 = vpack.c.b16 %v994, %v993
    %1011 = vmatprep.subr.bf16.mxu0 0
    %1012 = vmatpush1.bf16.msra.mxu0 %v1002
    %1013 = vmatprep.subr.bf16.mxu0 0
    %1014 = vmatpush1.bf16.msra.mxu0 %v1001
    %1015 = vmatprep.subr.bf16.mxu0 0
    %1016 = vmatpush1.bf16.msra.mxu0 %v1000
    %1017 = vmatprep.subr.bf16.mxu0 0
    %1018 = vmatpush1.bf16.msra.mxu0 %v999
    %1019 = vmatprep.subr.bf16.mxu0 0
    %1020 = vmatpush1.bf16.msra.mxu0 %v998
    %1021 = vmatprep.subr.bf16.mxu0 0
    %1022 = vmatpush1.bf16.msra.mxu0 %v997
    %1023 = vmatprep.subr.bf16.mxu0 0
    %1024 = vmatpush1.bf16.msra.mxu0 %v996
    %1025 = vmatprep.subr.bf16.mxu0 0
    %1026 = vmatpush1.bf16.msra.mxu0 %v995
    %1027 = vmatprep.subr.bf16.mxu0 0
    %1028 = vmatpush2.bf16.msra.mxu0 0
    %1029 = vmatprep.subr.bf16.mxu0 0
    %1030 = vmatpush2.bf16.msra.mxu0 0
    %1031 = vmatprep.subr.bf16.mxu0 0
    %1032 = vmatpush2.bf16.msra.mxu0 0
    %1033 = vmatprep.subr.bf16.mxu0 0
    %1034 = vmatpush2.bf16.msra.mxu0 0
    %1035 = vmatprep.subr.bf16.mxu0 0
    %1036 = vmatpush2.bf16.msra.mxu0 0
    %1037 = vmatprep.subr.bf16.mxu0 0
    %1038 = vmatpush2.bf16.msra.mxu0 0
    %1039 = vmatprep.subr.bf16.mxu0 0
    %1040 = vmatpush2.bf16.msra.mxu0 0
    %1041 = vmatprep.subr.bf16.mxu0 0
    %1042 = vmatpush2.bf16.msra.mxu0 0
    %1043 = vmatprep.mubr.bf16.mxu0 0
    %1044 = vmatmul.mubr.bf16.gmra.mxu0 %v940
    %v1045 = vpop.f32.mrf.mxu0
    %v1046 = vadd.f32 %v962, %v1045
    %v1047 = vpop.f32.mrf.mxu0
    %v1048 = vpop.f32.mrf.mxu0
    %v1049 = vadd.f32 %v962, %v1048
    %v1050 = vpop.f32.mrf.mxu0
    %1051 = vmatprep.mubr.bf16.mxu0 0
    %1052 = vmatmul.mubr.bf16.gmra.mxu0 %v941
    %v1053 = vpop.f32.mrf.mxu0
    %v1054 = vadd.f32 %v962, %v1053
    %v1055 = vpop.f32.mrf.mxu0
    %v1056 = vpop.f32.mrf.mxu0
    %v1057 = vadd.f32 %v962, %v1056
    %v1058 = vpop.f32.mrf.mxu0
    %1059 = vdwg.mxu0
    %v1060 = vmax.f32 %v1046, 0.0
    %v1061 = vmax.f32 %v1049, 0.0
    %v1062 = vmax.f32 %v1054, 0.0
    %v1063 = vmax.f32 %v1057, 0.0
    %v1064 = vrot.slane %v1060, 4
    %v1065 = vadd.f32 %v1060, %v1064
    %v1066 = vrot.slane %v1065, 2
    %v1067 = vadd.f32 %v1065, %v1066
    %v1068 = vrot.slane %v1067, 1
    %v1069 = vadd.f32 %v1067, %v1068
    %v1070 = vrot.slane %v1062, 4
    %v1071 = vadd.f32 %v1062, %v1070
    %v1072 = vrot.slane %v1071, 2
    %v1073 = vadd.f32 %v1071, %v1072
    %v1074 = vrot.slane %v1073, 1
    %v1075 = vadd.f32 %v1073, %v1074
    %v1076 = vrot.slane %v1061, 4
    %v1077 = vadd.f32 %v1061, %v1076
    %v1078 = vrot.slane %v1077, 2
    %v1079 = vadd.f32 %v1077, %v1078
    %v1080 = vrot.slane %v1079, 1
    %v1081 = vadd.f32 %v1079, %v1080
    %v1082 = vrot.slane %v1063, 4
    %v1083 = vadd.f32 %v1063, %v1082
    %v1084 = vrot.slane %v1083, 2
    %v1085 = vadd.f32 %v1083, %v1084
    %v1086 = vrot.slane %v1085, 1
    %v1087 = vadd.f32 %v1085, %v1086
    %v1088 = vpack.c.bf16 %v1069, %v1069
    %v1089 = vpack.c.bf16 %v1075, %v1075
    %s1090 = scalar_lea.vmem [#allocation3], 320
    %v1091 = vld [vmem:[%s1090] sm:$0xf]
    %v1092 = vld [vmem:[%s1090 + $0x4] sm:$0xf]
    %v1093 = vld [vmem:[%s1090 + $0x8] sm:$0xf]
    %v1094 = vld [vmem:[%s1090 + $0xc] sm:$0xf]
    %v1095 = vld [vmem:[%s1090 + $0x10] sm:$0xf]
    %v1096 = vld [vmem:[%s1090 + $0x14] sm:$0xf]
    %v1097 = vld [vmem:[%s1090 + $0x18] sm:$0xf]
    %v1098 = vld [vmem:[%s1090 + $0x1c] sm:$0xf]
    %v1099 = vld [vmem:[%s1090 + $0x20] sm:$0xf]
    %v1100 = vld [vmem:[%s1090 + $0x24] sm:$0xf]
    %v1101 = vld [vmem:[%s1090 + $0x28] sm:$0xf]
    %v1102 = vld [vmem:[%s1090 + $0x2c] sm:$0xf]
    %v1103 = vld [vmem:[%s1090 + $0x30] sm:$0xf]
    %v1104 = vld [vmem:[%s1090 + $0x34] sm:$0xf]
    %v1105 = vld [vmem:[%s1090 + $0x38] sm:$0xf]
    %v1106 = vld [vmem:[%s1090 + $0x3c] sm:$0xf]
    %v1107 = vpack.c.bf16 %v1081, %v1081
    %v1108 = vpack.c.bf16 %v1087, %v1087
    %s1109 = scalar_lea.vmem [#allocation3], 384
    %v1110 = vld [vmem:[%s1109] sm:$0xf]
    %v1111 = vld [vmem:[%s1109 + $0x4] sm:$0xf]
    %v1112 = vld [vmem:[%s1109 + $0x8] sm:$0xf]
    %v1113 = vld [vmem:[%s1109 + $0xc] sm:$0xf]
    %v1114 = vld [vmem:[%s1109 + $0x10] sm:$0xf]
    %v1115 = vld [vmem:[%s1109 + $0x14] sm:$0xf]
    %v1116 = vld [vmem:[%s1109 + $0x18] sm:$0xf]
    %v1117 = vld [vmem:[%s1109 + $0x1c] sm:$0xf]
    %v1118 = vld [vmem:[%s1109 + $0x20] sm:$0xf]
    %v1119 = vld [vmem:[%s1109 + $0x24] sm:$0xf]
    %v1120 = vld [vmem:[%s1109 + $0x28] sm:$0xf]
    %v1121 = vld [vmem:[%s1109 + $0x2c] sm:$0xf]
    %v1122 = vld [vmem:[%s1109 + $0x30] sm:$0xf]
    %v1123 = vld [vmem:[%s1109 + $0x34] sm:$0xf]
    %v1124 = vld [vmem:[%s1109 + $0x38] sm:$0xf]
    %v1125 = vld [vmem:[%s1109 + $0x3c] sm:$0xf]
    %v1128 = vunpack.c.l.b16 %v1107
    %v1129 = vunpack.c.l.b16 %v1108
    %vm1130 = vcmask 1041409
    %v1131 = vsel %vm1130, %v1129, %v1128
    %v1132 = vpack.c.b16 %v1131, %v1131
    %v1150 = vunpack.c.l.b16 %v1110
    %v1151 = vunpack.c.l.b16 %v1111
    %v1152 = vunpack.c.l.b16 %v1112
    %v1153 = vunpack.c.l.b16 %v1113
    %v1154 = vunpack.c.l.b16 %v1114
    %v1155 = vunpack.c.l.b16 %v1115
    %v1156 = vunpack.c.l.b16 %v1116
    %v1157 = vunpack.c.l.b16 %v1117
    %v1158 = vunpack.c.l.b16 %v1118
    %v1159 = vunpack.c.l.b16 %v1119
    %v1160 = vunpack.c.l.b16 %v1120
    %v1161 = vunpack.c.l.b16 %v1121
    %v1162 = vunpack.c.l.b16 %v1122
    %v1163 = vunpack.c.l.b16 %v1123
    %v1164 = vunpack.c.l.b16 %v1124
    %v1165 = vunpack.c.l.b16 %v1125
    %v1166 = vpack.c.b16 %v1151, %v1150
    %v1167 = vpack.c.b16 %v1153, %v1152
    %v1168 = vpack.c.b16 %v1155, %v1154
    %v1169 = vpack.c.b16 %v1157, %v1156
    %v1170 = vpack.c.b16 %v1159, %v1158
    %v1171 = vpack.c.b16 %v1161, %v1160
    %v1172 = vpack.c.b16 %v1163, %v1162
    %v1173 = vpack.c.b16 %v1165, %v1164
    %1182 = vmatprep.subr.bf16.mxu0 0
    %1183 = vmatpush1.bf16.msra.mxu0 %v1173
    %1184 = vmatprep.subr.bf16.mxu0 0
    %1185 = vmatpush1.bf16.msra.mxu0 %v1172
    %1186 = vmatprep.subr.bf16.mxu0 0
    %1187 = vmatpush1.bf16.msra.mxu0 %v1171
    %1188 = vmatprep.subr.bf16.mxu0 0
    %1189 = vmatpush1.bf16.msra.mxu0 %v1170
    %1190 = vmatprep.subr.bf16.mxu0 0
    %1191 = vmatpush1.bf16.msra.mxu0 %v1169
    %1192 = vmatprep.subr.bf16.mxu0 0
    %1193 = vmatpush1.bf16.msra.mxu0 %v1168
    %1194 = vmatprep.subr.bf16.mxu0 0
    %1195 = vmatpush1.bf16.msra.mxu0 %v1167
    %1196 = vmatprep.subr.bf16.mxu0 0
    %1197 = vmatpush1.bf16.msra.mxu0 %v1166
    %1198 = vmatprep.subr.bf16.mxu0 0
    %1199 = vmatpush2.bf16.msra.mxu0 0
    %1200 = vmatprep.subr.bf16.mxu0 0
    %1201 = vmatpush2.bf16.msra.mxu0 0
    %1202 = vmatprep.subr.bf16.mxu0 0
    %1203 = vmatpush2.bf16.msra.mxu0 0
    %1204 = vmatprep.subr.bf16.mxu0 0
    %1205 = vmatpush2.bf16.msra.mxu0 0
    %1206 = vmatprep.subr.bf16.mxu0 0
    %1207 = vmatpush2.bf16.msra.mxu0 0
    %1208 = vmatprep.subr.bf16.mxu0 0
    %1209 = vmatpush2.bf16.msra.mxu0 0
    %1210 = vmatprep.subr.bf16.mxu0 0
    %1211 = vmatpush2.bf16.msra.mxu0 0
    %1212 = vmatprep.subr.bf16.mxu0 0
    %1213 = vmatpush2.bf16.msra.mxu0 0
    %1214 = vmatprep.mubr.bf16.mxu0 0
    %1215 = vmatmul.mubr.bf16.gmra.mxu0 %v1132
    %v1216 = vpop.f32.mrf.mxu0
    %v1217 = vadd.f32 0.0, %v1216
    %v1218 = vpop.f32.mrf.mxu0
    %v1219 = vpop.f32.mrf.mxu0
    %v1220 = vpop.f32.mrf.mxu0
    %1221 = vdwg.mxu0
    %v1224 = vunpack.c.l.b16 %v1088
    %v1225 = vunpack.c.l.b16 %v1089
    %v1226 = vsel %vm1130, %v1225, %v1224
    %v1227 = vpack.c.b16 %v1226, %v1226
    %v1245 = vunpack.c.l.b16 %v1091
    %v1246 = vunpack.c.l.b16 %v1092
    %v1247 = vunpack.c.l.b16 %v1093
    %v1248 = vunpack.c.l.b16 %v1094
    %v1249 = vunpack.c.l.b16 %v1095
    %v1250 = vunpack.c.l.b16 %v1096
    %v1251 = vunpack.c.l.b16 %v1097
    %v1252 = vunpack.c.l.b16 %v1098
    %v1253 = vunpack.c.l.b16 %v1099
    %v1254 = vunpack.c.l.b16 %v1100
    %v1255 = vunpack.c.l.b16 %v1101
    %v1256 = vunpack.c.l.b16 %v1102
    %v1257 = vunpack.c.l.b16 %v1103
    %v1258 = vunpack.c.l.b16 %v1104
    %v1259 = vunpack.c.l.b16 %v1105
    %v1260 = vunpack.c.l.b16 %v1106
    %v1261 = vpack.c.b16 %v1246, %v1245
    %v1262 = vpack.c.b16 %v1248, %v1247
    %v1263 = vpack.c.b16 %v1250, %v1249
    %v1264 = vpack.c.b16 %v1252, %v1251
    %v1265 = vpack.c.b16 %v1254, %v1253
    %v1266 = vpack.c.b16 %v1256, %v1255
    %v1267 = vpack.c.b16 %v1258, %v1257
    %v1268 = vpack.c.b16 %v1260, %v1259
    %1277 = vmatprep.subr.bf16.mxu0 0
    %1278 = vmatpush1.bf16.msra.mxu0 %v1268
    %1279 = vmatprep.subr.bf16.mxu0 0
    %1280 = vmatpush1.bf16.msra.mxu0 %v1267
    %1281 = vmatprep.subr.bf16.mxu0 0
    %1282 = vmatpush1.bf16.msra.mxu0 %v1266
    %1283 = vmatprep.subr.bf16.mxu0 0
    %1284 = vmatpush1.bf16.msra.mxu0 %v1265
    %1285 = vmatprep.subr.bf16.mxu0 0
    %1286 = vmatpush1.bf16.msra.mxu0 %v1264
    %1287 = vmatprep.subr.bf16.mxu0 0
    %1288 = vmatpush1.bf16.msra.mxu0 %v1263
    %1289 = vmatprep.subr.bf16.mxu0 0
    %1290 = vmatpush1.bf16.msra.mxu0 %v1262
    %1291 = vmatprep.subr.bf16.mxu0 0
    %1292 = vmatpush1.bf16.msra.mxu0 %v1261
    %1293 = vmatprep.subr.bf16.mxu0 0
    %1294 = vmatpush2.bf16.msra.mxu0 0
    %1295 = vmatprep.subr.bf16.mxu0 0
    %1296 = vmatpush2.bf16.msra.mxu0 0
    %1297 = vmatprep.subr.bf16.mxu0 0
    %1298 = vmatpush2.bf16.msra.mxu0 0
    %1299 = vmatprep.subr.bf16.mxu0 0
    %1300 = vmatpush2.bf16.msra.mxu0 0
    %1301 = vmatprep.subr.bf16.mxu0 0
    %1302 = vmatpush2.bf16.msra.mxu0 0
    %1303 = vmatprep.subr.bf16.mxu0 0
    %1304 = vmatpush2.bf16.msra.mxu0 0
    %1305 = vmatprep.subr.bf16.mxu0 0
    %1306 = vmatpush2.bf16.msra.mxu0 0
    %1307 = vmatprep.subr.bf16.mxu0 0
    %1308 = vmatpush2.bf16.msra.mxu0 0
    %1309 = vmatprep.mubr.bf16.mxu0 0
    %1310 = vmatmul.mubr.bf16.gmra.mxu0 %v1227
    %v1311 = vpop.f32.mrf.mxu0
    %v1312 = vadd.f32 %v1217, %v1311
    %v1313 = vpop.f32.mrf.mxu0
    %v1314 = vpop.f32.mrf.mxu0
    %v1315 = vpop.f32.mrf.mxu0
    %1316 = vdwg.mxu0
    %v1317 = vlaneseq
    %v1318 = vshrl.u32 %v1317, 7
    %v1319 = vsub.s32 4, %v1318
    %v1320 = vrot.slane %v30, %v1319
    %v1321 = vadd.f32 %v1312, %v1320
    %v1322 = vmax.f32 %v1321, 0.0
    %v1323 = vpack.c.bf16 %v1322, %v1322
    %s1324 = scalar_lea.vmem [#allocation3], 448
    %v1325 = vld [vmem:[%s1324] sm:$0xf]
    %v1326 = vld [vmem:[%s1324 + $0x4] sm:$0xf]
    %v1327 = vld [vmem:[%s1324 + $0x8] sm:$0xf]
    %v1328 = vld [vmem:[%s1324 + $0xc] sm:$0xf]
    %v1329 = vld [vmem:[%s1324 + $0x10] sm:$0xf]
    %v1330 = vld [vmem:[%s1324 + $0x14] sm:$0xf]
    %v1331 = vld [vmem:[%s1324 + $0x18] sm:$0xf]
    %v1332 = vld [vmem:[%s1324 + $0x1c] sm:$0xf]
    %v1333 = vld [vmem:[%s1324 + $0x20] sm:$0xf]
    %v1334 = vld [vmem:[%s1324 + $0x24] sm:$0xf]
    %v1335 = vld [vmem:[%s1324 + $0x28] sm:$0xf]
    %v1336 = vld [vmem:[%s1324 + $0x2c] sm:$0xf]
    %v1337 = vld [vmem:[%s1324 + $0x30] sm:$0xf]
    %v1338 = vld [vmem:[%s1324 + $0x34] sm:$0xf]
    %v1339 = vld [vmem:[%s1324 + $0x38] sm:$0xf]
    %v1340 = vld [vmem:[%s1324 + $0x3c] sm:$0xf]
    %v1341 = vlaneseq
    %v1342 = vshrl.u32 %v1341, 7
    %v1343 = vsub.s32 5, %v1342
    %v1344 = vrot.slane %v30, %v1343
    %v1361 = vunpack.c.l.b16 %v1325
    %v1362 = vunpack.c.l.b16 %v1326
    %v1363 = vunpack.c.l.b16 %v1327
    %v1364 = vunpack.c.l.b16 %v1328
    %v1365 = vunpack.c.l.b16 %v1329
    %v1366 = vunpack.c.l.b16 %v1330
    %v1367 = vunpack.c.l.b16 %v1331
    %v1368 = vunpack.c.l.b16 %v1332
    %v1369 = vunpack.c.l.b16 %v1333
    %v1370 = vunpack.c.l.b16 %v1334
    %v1371 = vunpack.c.l.b16 %v1335
    %v1372 = vunpack.c.l.b16 %v1336
    %v1373 = vunpack.c.l.b16 %v1337
    %v1374 = vunpack.c.l.b16 %v1338
    %v1375 = vunpack.c.l.b16 %v1339
    %v1376 = vunpack.c.l.b16 %v1340
    %v1377 = vpack.c.b16 %v1362, %v1361
    %v1378 = vpack.c.b16 %v1364, %v1363
    %v1379 = vpack.c.b16 %v1366, %v1365
    %v1380 = vpack.c.b16 %v1368, %v1367
    %v1381 = vpack.c.b16 %v1370, %v1369
    %v1382 = vpack.c.b16 %v1372, %v1371
    %v1383 = vpack.c.b16 %v1374, %v1373
    %v1384 = vpack.c.b16 %v1376, %v1375
    %1393 = vmatprep.subr.bf16.mxu0 0
    %1394 = vmatpush1.bf16.msra.mxu0 %v1384
    %1395 = vmatprep.subr.bf16.mxu0 0
    %1396 = vmatpush1.bf16.msra.mxu0 %v1383
    %1397 = vmatprep.subr.bf16.mxu0 0
    %1398 = vmatpush1.bf16.msra.mxu0 %v1382
    %1399 = vmatprep.subr.bf16.mxu0 0
    %1400 = vmatpush1.bf16.msra.mxu0 %v1381
    %1401 = vmatprep.subr.bf16.mxu0 0
    %1402 = vmatpush1.bf16.msra.mxu0 %v1380
    %1403 = vmatprep.subr.bf16.mxu0 0
    %1404 = vmatpush1.bf16.msra.mxu0 %v1379
    %1405 = vmatprep.subr.bf16.mxu0 0
    %1406 = vmatpush1.bf16.msra.mxu0 %v1378
    %1407 = vmatprep.subr.bf16.mxu0 0
    %1408 = vmatpush1.bf16.msra.mxu0 %v1377
    %1409 = vmatprep.subr.bf16.mxu0 0
    %1410 = vmatpush2.bf16.msra.mxu0 0
    %1411 = vmatprep.subr.bf16.mxu0 0
    %1412 = vmatpush2.bf16.msra.mxu0 0
    %1413 = vmatprep.subr.bf16.mxu0 0
    %1414 = vmatpush2.bf16.msra.mxu0 0
    %1415 = vmatprep.subr.bf16.mxu0 0
    %1416 = vmatpush2.bf16.msra.mxu0 0
    %1417 = vmatprep.subr.bf16.mxu0 0
    %1418 = vmatpush2.bf16.msra.mxu0 0
    %1419 = vmatprep.subr.bf16.mxu0 0
    %1420 = vmatpush2.bf16.msra.mxu0 0
    %1421 = vmatprep.subr.bf16.mxu0 0
    %1422 = vmatpush2.bf16.msra.mxu0 0
    %1423 = vmatprep.subr.bf16.mxu0 0
    %1424 = vmatpush2.bf16.msra.mxu0 0
    %1425 = vmatprep.mubr.bf16.mxu0 0
    %1426 = vmatmul.mubr.bf16.gmra.mxu0 %v1323
    %v1427 = vpop.f32.mrf.mxu0
    %v1428 = vadd.f32 %v1344, %v1427
    %v1429 = vpop.f32.mrf.mxu0
    %v1430 = vpop.f32.mrf.mxu0
    %v1431 = vpop.f32.mrf.mxu0
    %1432 = vdwg.mxu0
    %v1433 = vmax.f32 %v1428, 0.0
    %v1434 = vpack.c.bf16 %v1433, %v1433
    %s1435 = scalar_lea.vmem [#allocation3], 512
    %v1436 = vld [vmem:[%s1435] sm:$0xf]
    %v1437 = vld [vmem:[%s1435 + $0x4] sm:$0xf]
    %v1438 = vld [vmem:[%s1435 + $0x8] sm:$0xf]
    %v1439 = vld [vmem:[%s1435 + $0xc] sm:$0xf]
    %v1440 = vld [vmem:[%s1435 + $0x10] sm:$0xf]
    %v1441 = vld [vmem:[%s1435 + $0x14] sm:$0xf]
    %v1442 = vld [vmem:[%s1435 + $0x18] sm:$0xf]
    %v1443 = vld [vmem:[%s1435 + $0x1c] sm:$0xf]
    %v1444 = vld [vmem:[%s1435 + $0x20] sm:$0xf]
    %v1445 = vld [vmem:[%s1435 + $0x24] sm:$0xf]
    %v1446 = vld [vmem:[%s1435 + $0x28] sm:$0xf]
    %v1447 = vld [vmem:[%s1435 + $0x2c] sm:$0xf]
    %v1448 = vld [vmem:[%s1435 + $0x30] sm:$0xf]
    %v1449 = vld [vmem:[%s1435 + $0x34] sm:$0xf]
    %v1450 = vld [vmem:[%s1435 + $0x38] sm:$0xf]
    %v1451 = vld [vmem:[%s1435 + $0x3c] sm:$0xf]
    %v1452 = vlaneseq
    %v1453 = vshrl.u32 %v1452, 7
    %v1454 = vsub.s32 6, %v1453
    %v1455 = vrot.slane %v30, %v1454
    %v1472 = vunpack.c.l.b16 %v1436
    %v1473 = vunpack.c.l.b16 %v1437
    %v1474 = vunpack.c.l.b16 %v1438
    %v1475 = vunpack.c.l.b16 %v1439
    %v1476 = vunpack.c.l.b16 %v1440
    %v1477 = vunpack.c.l.b16 %v1441
    %v1478 = vunpack.c.l.b16 %v1442
    %v1479 = vunpack.c.l.b16 %v1443
    %v1480 = vunpack.c.l.b16 %v1444
    %v1481 = vunpack.c.l.b16 %v1445
    %v1482 = vunpack.c.l.b16 %v1446
    %v1483 = vunpack.c.l.b16 %v1447
    %v1484 = vunpack.c.l.b16 %v1448
    %v1485 = vunpack.c.l.b16 %v1449
    %v1486 = vunpack.c.l.b16 %v1450
    %v1487 = vunpack.c.l.b16 %v1451
    %v1488 = vpack.c.b16 %v1473, %v1472
    %v1489 = vpack.c.b16 %v1475, %v1474
    %v1490 = vpack.c.b16 %v1477, %v1476
    %v1491 = vpack.c.b16 %v1479, %v1478
    %v1492 = vpack.c.b16 %v1481, %v1480
    %v1493 = vpack.c.b16 %v1483, %v1482
    %v1494 = vpack.c.b16 %v1485, %v1484
    %v1495 = vpack.c.b16 %v1487, %v1486
    %1504 = vmatprep.subr.bf16.mxu0 0
    %1505 = vmatpush1.bf16.msra.mxu0 %v1495
    %1506 = vmatprep.subr.bf16.mxu0 0
    %1507 = vmatpush1.bf16.msra.mxu0 %v1494
    %1508 = vmatprep.subr.bf16.mxu0 0
    %1509 = vmatpush1.bf16.msra.mxu0 %v1493
    %1510 = vmatprep.subr.bf16.mxu0 0
    %1511 = vmatpush1.bf16.msra.mxu0 %v1492
    %1512 = vmatprep.subr.bf16.mxu0 0
    %1513 = vmatpush1.bf16.msra.mxu0 %v1491
    %1514 = vmatprep.subr.bf16.mxu0 0
    %1515 = vmatpush1.bf16.msra.mxu0 %v1490
    %1516 = vmatprep.subr.bf16.mxu0 0
    %1517 = vmatpush1.bf16.msra.mxu0 %v1489
    %1518 = vmatprep.subr.bf16.mxu0 0
    %1519 = vmatpush1.bf16.msra.mxu0 %v1488
    %1520 = vmatprep.subr.bf16.mxu0 0
    %1521 = vmatpush2.bf16.msra.mxu0 0
    %1522 = vmatprep.subr.bf16.mxu0 0
    %1523 = vmatpush2.bf16.msra.mxu0 0
    %1524 = vmatprep.subr.bf16.mxu0 0
    %1525 = vmatpush2.bf16.msra.mxu0 0
    %1526 = vmatprep.subr.bf16.mxu0 0
    %1527 = vmatpush2.bf16.msra.mxu0 0
    %1528 = vmatprep.subr.bf16.mxu0 0
    %1529 = vmatpush2.bf16.msra.mxu0 0
    %1530 = vmatprep.subr.bf16.mxu0 0
    %1531 = vmatpush2.bf16.msra.mxu0 0
    %1532 = vmatprep.subr.bf16.mxu0 0
    %1533 = vmatpush2.bf16.msra.mxu0 0
    %1534 = vmatprep.subr.bf16.mxu0 0
    %1535 = vmatpush2.bf16.msra.mxu0 0
    %1536 = vmatprep.mubr.bf16.mxu0 0
    %1537 = vmatmul.mubr.bf16.gmra.mxu0 %v1434
    %v1538 = vpop.f32.mrf.mxu0
    %v1539 = vadd.f32 %v1455, %v1538
    %v1540 = vpop.f32.mrf.mxu0
    %v1541 = vpop.f32.mrf.mxu0
    %v1542 = vpop.f32.mrf.mxu0
    %1543 = vdwg.mxu0
    %vm1544 = vcmask 1041408
    %v1545 = vsel %vm1544, %v1539, -inf
    %1546 = vmax.xlane.f32.xlu0 %v1545
    %v1547 = vpop.xlane.xlu0 %1546
    %v1548 = vsub.f32 %v1539, %v1547
    %v1549 = vmul.f32 %v1548, 1.442695
    %v1550 = vpow.pop %v1549
    %v1551 = vsel %vm1544, %v1550, 0.0
    %1552 = vadd.xlane.f32.xlu0 %v1551
    %v1553 = vpop.xlane.xlu0 %1552
    %v1554 = vlog2.pop %v1553
    %v1555 = vmul.f32 %v1554, 0.6931472
    %v1556 = vadd.f32 %v1547, %v1555
    %v1557 = vsub.f32 %v1539, %v1556
    %1558 = vst [vmem:[#allocation6] sm:$0x3] %v1557
    // Predicated region
    $region18: #{decomposable_attention.1} parent=1 // pred_check
      _
    $region19: #{decomposable_attention.1} parent=1 // pred_check_branch
      %1560 = sbr.rel (0) target = $region21
    $region20: #{decomposable_attention.1} parent=1 // pred_region
      %s1562 = ssub.s32 32, 32
      %1563 = vsyncadd [#allocation5], %s1562
      %s1565 = sshll.u32 [#allocation6], 4
      %s1566 = int_to_ptr.vmem [resolvable:$true] %s1565
      %1568 = dma.vmem_to_hbm [thread:$0]  %s1566, 32, %s3, [#allocation5]
    $region21: #{decomposable_attention.1} parent=1 // pred_fallthru
      _
    // Predicated region
    $region22: #{decomposable_attention.1} parent=1 // pred_check
      _
    $region23: #{decomposable_attention.1} parent=1 // pred_check_branch
      %1570 = sbr.rel (0) target = $region25
    $region24: #{decomposable_attention.1} parent=1 // pred_region
      %1571 = dma.done [#allocation5], 32
    $region25: #{decomposable_attention.1} parent=1 // pred_fallthru
      _
    %1572 = vsyncpa [#allocation4], 1
    %1573 = vsyncpa [#allocation5], 1

</llo_original>
